<compile_context>
chip_gen: v7x
topology: tpu7x:2x2x1
jax: 0.10.0
libtpu: 0.0.40
codegen_flags: <defaults>
</compile_context>

<pallas_src>
import functools

import jax
import jax.numpy as jnp
from jax.experimental import pallas as pl
from jax.experimental.pallas import tpu as pltpu


# ----------------------------- Pallas kernel ------------------------------
def _gemma2_mlp_kernel(x_ref, wgu_ref, wd_ref, o_ref, acc_ref, *, ti):
    """One (m, i) grid step of the fused Gemma2 MLP.

    x_ref   : (tm, H)     input dtype; activation tile, resident across i
    wgu_ref : (H, 2*ti)   bf16; [gate tile i | up tile i] fused weight slab
    wd_ref  : (ti, H)     bf16; down-projection rows for intermediate tile i
    o_ref   : (tm, H)     bf16; output tile (written on the last i step)
    acc_ref : (tm, H)     f32 VMEM accumulator over the I reduction axis
    """
    i = pl.program_id(1)

    @pl.when(i == 0)
    def _init():
        acc_ref[...] = jnp.zeros_like(acc_ref)

    # Cast activations to the MXU operand dtype in-kernel (VPU, ~free).
    x = x_ref[...].astype(wgu_ref.dtype)

    # Single fused gate+up matmul -> (tm, 2*ti), f32 MXU accumulation.
    gu = jnp.dot(x, wgu_ref[...], preferred_element_type=jnp.float32)
    g = gu[:, :ti]          # lane-aligned split: ti is a multiple of 128
    u = gu[:, ti:]

    # GELU (tanh approximation == torch approximate='tanh') * up, in f32.
    h = jax.nn.gelu(g, approximate=True) * u

    # Partial down-projection for this intermediate tile, accumulated in f32.
    acc_ref[...] += jnp.dot(h.astype(wd_ref.dtype), wd_ref[...],
                            preferred_element_type=jnp.float32)

    @pl.when(i == pl.num_programs(1) - 1)
    def _finalize():
        o_ref[...] = acc_ref[...].astype(o_ref.dtype)


# ----------------------------- tiling helpers ------------------------------
def _round_up(x: int, m: int) -> int:
    return ((x + m - 1) // m) * m


def _vmem_bytes(tm: int, ti: int, H: int, *, w_itemsize: int = 2,
                x_itemsize: int = 4, out_itemsize: int = 2) -> int:
    """Double-buffered pipelined blocks + persistent f32 accumulator."""
    wgu_blk = H * (2 * ti) * w_itemsize
    wd_blk = ti * H * w_itemsize
    x_blk = tm * H * x_itemsize
    o_blk = tm * H * out_itemsize
    acc = tm * H * 4
    return 2 * (wgu_blk + wd_blk + x_blk + o_blk) + acc


def _vmem_budget_bytes() -> int:
    """Conservative per-kernel VMEM budget derived from the actual chip."""
    try:
        info = pltpu.get_tpu_info()
        cap = getattr(info, "vmem_capacity_bytes", None)
        if cap:
            return int(cap * 0.7)     # 128 MiB (v5e/v6e) -> ~89 MiB, 64 MiB (v7x) -> ~45 MiB
    except Exception:
        pass
    return 40 << 20                   # safe on every generation


def select_intermediate_tile(H: int, I: int, *, vmem_budget: int | None = None) -> int:
    """Largest lane-dense intermediate tile whose working set fits the budget."""
    budget = vmem_budget if vmem_budget is not None else _vmem_budget_bytes()
    i_pad = _round_up(I, 128)
    cands = [c for c in (512, 256, 128) if c <= i_pad] or [i_pad]
    for ti in cands:
        if _vmem_bytes(256, ti, H) <= budget:   # worst-case tm = 256
            return ti
    return cands[-1]


# --------------------------- one-time weight prep ---------------------------
def prepare_gemma2_mlp_weights(w_gate, w_up, w_down, *, ti,
                               compute_dtype=jnp.bfloat16):
    """Call ONCE at weight-load time (outside the per-step jit).

    w_gate, w_up : (H, I)  stored (in, out)  (= torch weight.T)
    w_down       : (I, H)  stored (in, out)
    Returns:
      wgu : (n_i, H, 2*ti)  bf16  — block i is [gate tile i | up tile i]
      wd  : (n_i, ti, H)    bf16  — block i is the matching down-proj rows
    I is zero-padded up to a multiple of ti (exact: padded lanes contribute 0).
    """
    H, I = w_gate.shape
    i_pad = _round_up(I, ti)
    if i_pad != I:
        pad = i_pad - I
        w_gate = jnp.pad(w_gate, ((0, 0), (0, pad)))
        w_up = jnp.pad(w_up, ((0, 0), (0, pad)))
        w_down = jnp.pad(w_down, ((0, pad), (0, 0)))
    n_i = i_pad // ti

    wg = w_gate.astype(compute_dtype).reshape(H, n_i, ti)
    wu = w_up.astype(compute_dtype).reshape(H, n_i, ti)
    wgu = jnp.concatenate([wg, wu], axis=-1).transpose(1, 0, 2)   # (n_i, H, 2*ti)
    wd = w_down.astype(compute_dtype).reshape(n_i, ti, H)          # (n_i, ti, H)
    return wgu, wd


# ------------------------------- forward -----------------------------------
def gemma2_mlp_fused(x, wgu, wd):
    """Fused Gemma2MLP forward on pre-prepared weights.

    x   : (..., H) activations (any float dtype; cast to bf16 in-kernel)
    wgu : (n_i, H, 2*ti) bf16 fused gate|up weight (from prepare_*)
    wd  : (n_i, ti, H)   bf16 down-proj weight     (from prepare_*)
    Returns y of shape (..., H) in bf16 (compute dtype).
    """
    n_i, H, two_ti = wgu.shape
    ti = two_ti // 2
    out_dtype = wgu.dtype

    orig_shape = x.shape
    M = x.size // H
    xf = x.reshape(M, H)

    tm = M if M <= 256 else 256
    n_m = pl.cdiv(M, tm)

    ws = _vmem_bytes(tm, ti, H,
                     w_itemsize=jnp.dtype(wgu.dtype).itemsize,
                     x_itemsize=jnp.dtype(xf.dtype).itemsize,
                     out_itemsize=jnp.dtype(out_dtype).itemsize)
    vmem_limit = min(max(ws + (8 << 20), 32 << 20), 96 << 20)

    out = pl.pallas_call(
        functools.partial(_gemma2_mlp_kernel, ti=ti),
        grid=(n_m, n_i),
        in_specs=[
            # activations: constant in i -> resident across the reduction
            pl.BlockSpec((tm, H), lambda m, i: (m, 0)),
            # fused gate|up weight: one contiguous HBM slab per i step
            pl.BlockSpec((None, H, 2 * ti), lambda m, i: (i, 0, 0)),
            # down-projection rows for tile i: contiguous slab
            pl.BlockSpec((None, ti, H), lambda m, i: (i, 0, 0)),
        ],
        out_specs=pl.BlockSpec((tm, H), lambda m, i: (m, 0)),
        out_shape=jax.ShapeDtypeStruct((M, H), out_dtype),
        scratch_shapes=[pltpu.VMEM((tm, H), jnp.float32)],
        compiler_params=pltpu.CompilerParams(
            dimension_semantics=("parallel", "arbitrary"),
            vmem_limit_bytes=vmem_limit),
    )(xf, wgu, wd)

    return out.reshape(orig_shape[:-1] + (H,))


# --------------------------------- main -------------------------------------
if __name__ == "__main__":
    key = jax.random.PRNGKey(0)
    kx, kg, ku, kd = jax.random.split(key, 4)

    # Small but lane-dense config (multiples of 128).
    B, S = 2, 8
    HIDDEN, INTER = 256, 1024

    x = jax.random.normal(kx, (B, S, HIDDEN), dtype=jnp.float32)
    w_gate = jax.random.normal(kg, (HIDDEN, INTER), dtype=jnp.float32) * (HIDDEN ** -0.5)
    w_up = jax.random.normal(ku, (HIDDEN, INTER), dtype=jnp.float32) * (HIDDEN ** -0.5)
    w_down = jax.random.normal(kd, (INTER, HIDDEN), dtype=jnp.float32) * (INTER ** -0.5)

    # One-time weight prep (hoisted out of the forward path).
    ti = select_intermediate_tile(HIDDEN, INTER)
    wgu, wd = prepare_gemma2_mlp_weights(w_gate, w_up, w_down, ti=ti)
    wgu, wd = jax.block_until_ready((wgu, wd))

    fwd = jax.jit(gemma2_mlp_fused)
    out = fwd(x, wgu, wd)
    jax.block_until_ready(out)
    assert out.shape == (B, S, HIDDEN)

    # Pure-JAX reference with the same bf16 operand casts / f32 accumulation.
    xb = x.reshape(-1, HIDDEN).astype(jnp.bfloat16)
    g_ref = jnp.dot(xb, w_gate.astype(jnp.bfloat16), preferred_element_type=jnp.float32)
    u_ref = jnp.dot(xb, w_up.astype(jnp.bfloat16), preferred_element_type=jnp.float32)
    h_ref = jax.nn.gelu(g_ref, approximate=True) * u_ref
    ref = jnp.dot(h_ref.astype(jnp.bfloat16), w_down.astype(jnp.bfloat16),
                  preferred_element_type=jnp.float32).reshape(B, S, HIDDEN)

    out_f32 = out.astype(jnp.float32)
    assert jnp.allclose(out_f32, ref, rtol=5e-2, atol=5e-2), \
        f"max abs err = {float(jnp.max(jnp.abs(out_f32 - ref)))}"
    print("KERNEL_OK")
</pallas_src>

<mosaic_0001>
module attributes {stable_mosaic.version = 11 : i64} {
  func.func @_gemma2_mlp_kernel(%arg0: i32, %arg1: i32, %arg2: memref<16x256xf32, #tpu.memory_space<vmem>>, %arg3: memref<1x256x1024xbf16, #tpu.memory_space<vmem>>, %arg4: memref<1x512x256xbf16, #tpu.memory_space<vmem>>, %arg5: memref<16x256xbf16, #tpu.memory_space<vmem>>, %arg6: memref<16x256xf32, #tpu.memory_space<vmem>>) attributes {dimension_semantics = [#tpu.dimension_semantics<parallel>, #tpu.dimension_semantics<arbitrary>], iteration_bounds = array<i64: 1, 2>, scalar_prefetch = 0 : i64, scratch_operands = 1 : i64, tpu.core_type = #tpu.core_type<tc>, window_params = [{transform_indices = @transform_0, window_bounds = array<i64: 16, 256>}, {transform_indices = @transform_1, window_bounds = array<i64: 1, 256, 1024>}, {transform_indices = @transform_2, window_bounds = array<i64: 1, 512, 256>}, {transform_indices = @transform_3, window_bounds = array<i64: 16, 256>}]} {
    %c0_i32 = arith.constant 0 : i32
    %0 = arith.cmpi eq, %arg1, %c0_i32 : i32
    %1 = arith.extui %0 : i1 to i32
    %c0_i32_0 = arith.constant 0 : i32
    %2 = arith.cmpi ne, %1, %c0_i32_0 : i32
    scf.if %2 {
      %cst_18 = arith.constant 0.000000e+00 : f32
      %34 = vector.broadcast %cst_18 : f32 to vector<16x256xf32>
      %c0_19 = arith.constant 0 : index
      %c0_20 = arith.constant 0 : index
      %35 = vector.load %arg6[%c0_19, %c0_20] : memref<16x256xf32, #tpu.memory_space<vmem>>, vector<16x256xf32>
      tpu.vector_store %arg6[%c0_19, %c0_20], %34 {strides = array<i32>} : memref<16x256xf32, #tpu.memory_space<vmem>>, vector<16x256xf32>,
    } else {
    }
    %c0 = arith.constant 0 : index
    %c0_1 = arith.constant 0 : index
    %3 = vector.load %arg2[%c0, %c0_1] : memref<16x256xf32, #tpu.memory_space<vmem>>, vector<16x256xf32>
    %4 = arith.truncf %3 : vector<16x256xf32> to vector<16x256xbf16>
    %c0_2 = arith.constant 0 : index
    %c0_3 = arith.constant 0 : index
    %c0_4 = arith.constant 0 : index
    %5 = vector.load %arg3[%c0_2, %c0_3, %c0_4] : memref<1x256x1024xbf16, #tpu.memory_space<vmem>>, vector<1x256x1024xbf16>
    %6 = vector.shape_cast %5 : vector<1x256x1024xbf16> to vector<256x1024xbf16>
    %cst = arith.constant dense<0.000000e+00> : vector<16x1024xf32>
    %7 = tpu.matmul %4, %6, %cst {dimension_numbers = #tpu.dot_dimension_numbers<[1], [0], [0], [1], [0, 0, 1, 1], [], []>} : vector<16x256xbf16>, vector<256x1024xbf16>, vector<16x1024xf32> -> vector<16x1024xf32>
    %8 = vector.extract_strided_slice %7 {offsets = [0, 0], sizes = [16, 512], strides = [1, 1]} : vector<16x1024xf32> to vector<16x512xf32>
    %9 = vector.extract_strided_slice %7 {offsets = [0, 512], sizes = [16, 512], strides = [1, 1]} : vector<16x1024xf32> to vector<16x512xf32>
    %10 = arith.mulf %8, %8 : vector<16x512xf32>
    %11 = arith.mulf %8, %10 : vector<16x512xf32>
    %cst_5 = arith.constant 4.471500e-02 : f32
    %12 = vector.broadcast %cst_5 : f32 to vector<16x512xf32>
    %13 = arith.mulf %12, %11 : vector<16x512xf32>
    %14 = arith.addf %8, %13 : vector<16x512xf32>
    %cst_6 = arith.constant 0.797884583 : f32
    %15 = vector.broadcast %cst_6 : f32 to vector<16x512xf32>
    %16 = arith.mulf %15, %14 : vector<16x512xf32>
    %17 = math.tanh %16 : vector<16x512xf32>
    %cst_7 = arith.constant 1.000000e+00 : f32
    %18 = vector.broadcast %cst_7 : f32 to vector<16x512xf32>
    %19 = arith.addf %18, %17 : vector<16x512xf32>
    %cst_8 = arith.constant 5.000000e-01 : f32
    %20 = vector.broadcast %cst_8 : f32 to vector<16x512xf32>
    %21 = arith.mulf %20, %19 : vector<16x512xf32>
    %22 = arith.mulf %8, %21 : vector<16x512xf32>
    %23 = arith.mulf %22, %9 : vector<16x512xf32>
    %c0_9 = arith.constant 0 : index
    %c0_10 = arith.constant 0 : index
    %24 = vector.load %arg6[%c0_9, %c0_10] : memref<16x256xf32, #tpu.memory_space<vmem>>, vector<16x256xf32>
    %25 = arith.truncf %23 : vector<16x512xf32> to vector<16x512xbf16>
    %c0_11 = arith.constant 0 : index
    %c0_12 = arith.constant 0 : index
    %c0_13 = arith.constant 0 : index
    %26 = vector.load %arg4[%c0_11, %c0_12, %c0_13] : memref<1x512x256xbf16, #tpu.memory_space<vmem>>, vector<1x512x256xbf16>
    %27 = vector.shape_cast %26 : vector<1x512x256xbf16> to vector<512x256xbf16>
    %cst_14 = arith.constant dense<0.000000e+00> : vector<16x256xf32>
    %28 = tpu.matmul %25, %27, %cst_14 {dimension_numbers = #tpu.dot_dimension_numbers<[1], [0], [0], [1], [0, 0, 1, 1], [], []>} : vector<16x512xbf16>, vector<512x256xbf16>, vector<16x256xf32> -> vector<16x256xf32>
    %29 = arith.addf %24, %28 : vector<16x256xf32>
    %c0_15 = arith.constant 0 : index
    %c0_16 = arith.constant 0 : index
    %30 = vector.load %arg6[%c0_15, %c0_16] : memref<16x256xf32, #tpu.memory_space<vmem>>, vector<16x256xf32>
    tpu.vector_store %arg6[%c0_15, %c0_16], %29 {strides = array<i32>} : memref<16x256xf32, #tpu.memory_space<vmem>>, vector<16x256xf32>,
    %c1_i32 = arith.constant 1 : i32
    %31 = arith.cmpi eq, %arg1, %c1_i32 : i32
    %32 = arith.extui %31 : i1 to i32
    %c0_i32_17 = arith.constant 0 : i32
    %33 = arith.cmpi ne, %32, %c0_i32_17 : i32
    scf.if %33 {
      %c0_18 = arith.constant 0 : index
      %c0_19 = arith.constant 0 : index
      %34 = vector.load %arg6[%c0_18, %c0_19] : memref<16x256xf32, #tpu.memory_space<vmem>>, vector<16x256xf32>
      %35 = arith.truncf %34 : vector<16x256xf32> to vector<16x256xbf16>
      %c0_20 = arith.constant 0 : index
      %c0_21 = arith.constant 0 : index
      %36 = vector.load %arg5[%c0_20, %c0_21] : memref<16x256xbf16, #tpu.memory_space<vmem>>, vector<16x256xbf16>
      tpu.vector_store %arg5[%c0_20, %c0_21], %35 {strides = array<i32>} : memref<16x256xbf16, #tpu.memory_space<vmem>>, vector<16x256xbf16>,
    } else {
    }
    return
  }
  func.func @transform_0(%arg0: i32, %arg1: i32) -> (i32, i32) {
    %c0_i32 = arith.constant 0 : i32
    %c0_i32_0 = arith.constant 0 : i32
    return %arg0, %c0_i32 : i32, i32
  }
  func.func @transform_1(%arg0: i32, %arg1: i32) -> (i32, i32, i32) {
    %c0_i32 = arith.constant 0 : i32
    %c0_i32_0 = arith.constant 0 : i32
    %c0_i32_1 = arith.constant 0 : i32
    return %arg1, %c0_i32, %c0_i32_0 : i32, i32, i32
  }
  func.func @transform_2(%arg0: i32, %arg1: i32) -> (i32, i32, i32) {
    %c0_i32 = arith.constant 0 : i32
    %c0_i32_0 = arith.constant 0 : i32
    %c0_i32_1 = arith.constant 0 : i32
    return %arg1, %c0_i32, %c0_i32_0 : i32, i32, i32
  }
  func.func @transform_3(%arg0: i32, %arg1: i32) -> (i32, i32) {
    %c0_i32 = arith.constant 0 : i32
    %c0_i32_0 = arith.constant 0 : i32
    return %arg0, %c0_i32 : i32, i32
  }
}

</mosaic_0001>

<llo_original>
// kernel: gemma2_mlp_fused.1
$region0: #{gemma2_mlp_fused.1}
  #allocation0 [shape = 'u32[]', space=smem, size = 0x4, offset = 0x4, fixed_abs, tag = 'smem constant byte address 0x4 - core index']
  #allocation1 [shape = 'u32[144,128]{1,0:T(1,128)}', space=vmem, size = 0x12000, scoped, tag = 'internal scratch']
  #allocation2 [shape = 'f32[16,256]{1,0:T(8,128)}', space=vmem, size = 0x4000, scoped, tag = 'scratch operand']
  %s0 = inlined_call_operand.hbm [shape: f32[16,256], index: 0, kind: input, shape index: {}]
  %s1 = inlined_call_operand.hbm [shape: bf16[2,256,1024], index: 1, kind: input, shape index: {}]
  %s2 = inlined_call_operand.hbm [shape: bf16[2,512,256], index: 2, kind: input, shape index: {}]
  %s3 = inlined_call_operand.hbm [shape: bf16[16,256], index: 3, kind: output, shape index: {}]
  %s4 = sld [smem:[#allocation0]]
  $region65: #{gemma2_mlp_fused.1} parent=0
    _
  %s6 = ssub.s32 1, %s4
  %s7 = scalar_select 0, %s6, %s4
  $region1: #{gemma2_mlp_fused.1} parent=0
    #allocation3 [shape = 'u8[16384]{0}', space=vmem, size = 0x4000, scoped, tag = 'input window, operand 0, single buffered']
    #allocation4 [shape = 's32[2]{0}', space=sflag, size = 0x8, scoped, tag = 'scoped memory for gemma2_mlp_fused.1']
    #allocation5 [shape = 's32[2]{0}', space=sflag, size = 0x8, scoped, tag = 'scoped memory for gemma2_mlp_fused.1']
    #allocation6 [shape = 'u8[1048576]{0}', space=vmem, size = 0x100000, scoped, tag = 'input window, operand 1']
    #allocation7 [shape = 's32[2]{0}', space=sflag, size = 0x8, scoped, tag = 'scoped memory for gemma2_mlp_fused.1']
    #allocation8 [shape = 'u8[524288]{0}', space=vmem, size = 0x80000, scoped, tag = 'input window, operand 2']
    #allocation9 [shape = 'u8[8192]{0}', space=vmem, size = 0x2000, scoped, tag = 'output window, operand 0, single buffered']
    %8 = vsyncpa [#allocation4], 0
    %9 = vsyncpa [#allocation7], 0
    %s10 = scalar_lea.sflag [#allocation7], 1
    %11 = vsyncpa %s10, 0
    %12 = vsyncpa [#allocation5], 0
    loop: start=0, step=1, limit=4
    $region2: #{gemma2_mlp_fused.1} parent=1 // loop_pre_header
      _
    $region3: #{gemma2_mlp_fused.1} parent=1 // loop_header
      %s14 = sphi 0, %s18
      %p15 = scmp.ge.s32.totalorder %s14, 4
      %s21 = sphi 0, %s33
      %s22 = sphi 0, %s29
      %s23 = sphi 0, %s21
      %s24 = sphi 0, %s22
      %s25 = sphi 0, %s23
      %s26 = sphi 0, %s24
      %s36 = sphi 0, %s38
      %s39 = sphi 0, %s36
      %s40 = sphi 0, %s39
      %s56 = sphi 0, %s40
      %s62 = sphi 0, %s64
      %s65 = sphi 0, %s62
      %s66 = sphi 0, %s65
      %s82 = sphi 0, %s66
      %s88 = sphi 0, %s90
      %s91 = sphi 0, %s88
      %s92 = sphi 0, %s91
      %s108 = sphi 0, %s92
      %s114 = sphi 0, %s116
      %s117 = sphi 0, %s114
      %s118 = sphi 0, %s117
      %s134 = sphi 0, %s118
    $region4: #{gemma2_mlp_fused.1} parent=1 // loop_header_branch
      %17 = sbr.rel (%p15) target = $region8
    $region5: #{gemma2_mlp_fused.1} parent=1 // loop_body
      %s19 = ssub.s32 %s14, 1
      %s20 = ssub.s32 %s14, 2
      %s27 = sadd.s32 1, %s22
      %p28 = scmp.ge.s32.totalorder %s27, 2
      %s29 = scalar_select %p28, 0, %s27
      %s30 = sadd.s32 1, %s21
      %s31 = scalar_select %p28, %s30, %s21
      %p32 = scmp.ge.s32.totalorder %s31, 1
      %s33 = scalar_select %p32, 0, %s31
      %s34 = ssub.s32 %s21, %s33
      %p35 = scmp.eq.s32.totalorder %s34, 0
      %s37 = sadd.s32 %s36, 1
      %s38 = scalar_select %p35, %s36, %s37
      %p41 = pneg %p35
      %p42 = scmp.eq.s32.totalorder %s14, 1
      %p43 = por %p41, %p42
      %p44 = scmp.ne.s32.totalorder %s36, %s39
      %p45 = scmp.eq.s32.totalorder %s14, 0
      %p46 = por %p44, %p45
      %p47 = scmp.ne.s32.totalorder %s36, %s39
      %p48 = scmp.eq.s32.totalorder %s19, 1
      %p49 = por %p47, %p48
      %p50 = scmp.ne.s32.totalorder %s39, %s40
      %p51 = scmp.eq.s32.totalorder %s19, 0
      %p52 = por %p50, %p51
      %p53 = scmp.ne.s32.totalorder %s39, %s40
      %p54 = scmp.eq.s32.totalorder %s20, 1
      %p55 = por %p53, %p54
      %p57 = scmp.ne.s32.totalorder %s40, %s56
      %p58 = scmp.eq.s32.totalorder %s20, 0
      %p59 = por %p57, %p58
      %s60 = ssub.s32 %s22, %s29
      %p61 = scmp.eq.s32.totalorder %s60, 0
      %s63 = sadd.s32 %s62, 1
      %s64 = scalar_select %p61, %s62, %s63
      %p67 = pneg %p61
      %p68 = scmp.eq.s32.totalorder %s14, 1
      %p69 = por %p67, %p68
      %p70 = scmp.ne.s32.totalorder %s62, %s65
      %p71 = scmp.eq.s32.totalorder %s14, 0
      %p72 = por %p70, %p71
      %p73 = scmp.ne.s32.totalorder %s62, %s65
      %p74 = scmp.eq.s32.totalorder %s19, 1
      %p75 = por %p73, %p74
      %p76 = scmp.ne.s32.totalorder %s65, %s66
      %p77 = scmp.eq.s32.totalorder %s19, 0
      %p78 = por %p76, %p77
      %p79 = scmp.ne.s32.totalorder %s65, %s66
      %p80 = scmp.eq.s32.totalorder %s20, 1
      %p81 = por %p79, %p80
      %p83 = scmp.ne.s32.totalorder %s66, %s82
      %p84 = scmp.eq.s32.totalorder %s20, 0
      %p85 = por %p83, %p84
      %s86 = ssub.s32 %s22, %s29
      %p87 = scmp.eq.s32.totalorder %s86, 0
      %s89 = sadd.s32 %s88, 1
      %s90 = scalar_select %p87, %s88, %s89
      %p93 = pneg %p87
      %p94 = scmp.eq.s32.totalorder %s14, 1
      %p95 = por %p93, %p94
      %p96 = scmp.ne.s32.totalorder %s88, %s91
      %p97 = scmp.eq.s32.totalorder %s14, 0
      %p98 = por %p96, %p97
      %p99 = scmp.ne.s32.totalorder %s88, %s91
      %p100 = scmp.eq.s32.totalorder %s19, 1
      %p101 = por %p99, %p100
      %p102 = scmp.ne.s32.totalorder %s91, %s92
      %p103 = scmp.eq.s32.totalorder %s19, 0
      %p104 = por %p102, %p103
      %p105 = scmp.ne.s32.totalorder %s91, %s92
      %p106 = scmp.eq.s32.totalorder %s20, 1
      %p107 = por %p105, %p106
      %p109 = scmp.ne.s32.totalorder %s92, %s108
      %p110 = scmp.eq.s32.totalorder %s20, 0
      %p111 = por %p109, %p110
      %s112 = ssub.s32 %s21, %s33
      %p113 = scmp.eq.s32.totalorder %s112, 0
      %s115 = sadd.s32 %s114, 1
      %s116 = scalar_select %p113, %s114, %s115
      %p119 = pneg %p113
      %p120 = scmp.eq.s32.totalorder %s14, 1
      %p121 = por %p119, %p120
      %p122 = scmp.ne.s32.totalorder %s114, %s117
      %p123 = scmp.eq.s32.totalorder %s14, 0
      %p124 = por %p122, %p123
      %p125 = scmp.ne.s32.totalorder %s114, %s117
      %p126 = scmp.eq.s32.totalorder %s19, 1
      %p127 = por %p125, %p126
      %p128 = scmp.ne.s32.totalorder %s117, %s118
      %p129 = scmp.eq.s32.totalorder %s19, 0
      %p130 = por %p128, %p129
      %p131 = scmp.ne.s32.totalorder %s117, %s118
      %p132 = scmp.eq.s32.totalorder %s20, 1
      %p133 = por %p131, %p132
      %p135 = scmp.ne.s32.totalorder %s118, %s134
      %p136 = scmp.eq.s32.totalorder %s20, 0
      %p137 = por %p135, %p136
      %p138 = scmp.le.s32.totalorder 1, %s14
      %p139 = scmp.lt.s32.totalorder %s14, 3
      %p140 = pnand %p138, %p139
      %p141 = pneg %p140
      // Predicated region
      $region9: #{gemma2_mlp_fused.1} parent=5 // pred_check
        _
      $region10: #{gemma2_mlp_fused.1} parent=5 // pred_check_branch
        %143 = sbr.rel (%p140) target = $region12
      $region11: #{gemma2_mlp_fused.1} parent=5 // pred_region
        %s144 = ssub.s32 %s14, 1
        // Predicated region
        $region13: #{gemma2_mlp_fused.1} parent=11 // pred_check
          %p145 = pneg %p52
        $region14: #{gemma2_mlp_fused.1} parent=11 // pred_check_branch
          %147 = sbr.rel (%p145) target = $region16
        $region15: #{gemma2_mlp_fused.1} parent=11 // pred_region
          %s148 = smul.u32 2, %s23
          %s150 = ssub.s32 512, 512
          %151 = vsyncadd [#allocation4], %s150
          %s152 = smul.addr %s148, 2
          %s153 = smul.addr %s152, 128
          %s154 = scalar_lea.hbm %s0, %s153
          %s155 = sshll.u32 [#allocation3], 4
          %s156 = int_to_ptr.vmem [resolvable:$true] %s155
          %161 = dma.hbm_to_vmem [thread:$0]  %s154, 512, %s156, [#allocation4], 256, 256, 16
        $region16: #{gemma2_mlp_fused.1} parent=11 // pred_fallthru
          _
      $region12: #{gemma2_mlp_fused.1} parent=5 // pred_fallthru
        _
      %p162 = scmp.lt.s32.totalorder %s14, 2
      // Predicated region
      $region17: #{gemma2_mlp_fused.1} parent=5 // pred_check
        %p163 = pneg %p162
      $region18: #{gemma2_mlp_fused.1} parent=5 // pred_check_branch
        %165 = sbr.rel (%p163) target = $region20
      $region19: #{gemma2_mlp_fused.1} parent=5 // pred_region
        // Predicated region
        $region21: #{gemma2_mlp_fused.1} parent=19 // pred_check
          %p166 = pneg %p72
        $region22: #{gemma2_mlp_fused.1} parent=19 // pred_check_branch
          %168 = sbr.rel (%p166) target = $region24
        $region23: #{gemma2_mlp_fused.1} parent=19 // pred_region
          %s169 = sand.u32 %s14, 1
          %s170 = scalar_lea.sflag [#allocation7], %s169
          %s171 = sand.u32 %s62, 1
          %s172 = smul.addr %s171, 1024
          %s173 = scalar_lea.vmem [#allocation6], %s172
          %s175 = ssub.s32 16384, 16384
          %176 = vsyncadd %s170, %s175
          %s177 = smul.addr %s22, 256
          %s178 = smul.addr %s177, 64
          %s179 = scalar_lea.hbm %s1, %s178
          %s180 = sshll.u32 %s173, 4
          %s181 = int_to_ptr.vmem [resolvable:$true] %s180
          %186 = dma.hbm_to_vmem [thread:$0]  %s179, 16384, %s181, %s170, 512, 512, 32
        $region24: #{gemma2_mlp_fused.1} parent=19 // pred_fallthru
          _
        // Predicated region
        $region25: #{gemma2_mlp_fused.1} parent=19 // pred_check
          %p187 = pneg %p98
        $region26: #{gemma2_mlp_fused.1} parent=19 // pred_check_branch
          %189 = sbr.rel (%p187) target = $region28
        $region27: #{gemma2_mlp_fused.1} parent=19 // pred_region
          %s190 = sand.u32 %s14, 1
          %s191 = scalar_lea.sflag [#allocation7], %s190
          %s192 = sand.u32 %s88, 1
          %s193 = smul.addr %s192, 512
          %s194 = scalar_lea.vmem [#allocation8], %s193
          %s196 = ssub.s32 8192, 8192
          %197 = vsyncadd %s191, %s196
          %s198 = smul.addr %s22, 128
          %s199 = smul.addr %s198, 64
          %s200 = scalar_lea.hbm %s2, %s199
          %s201 = sshll.u32 %s194, 4
          %s202 = int_to_ptr.vmem [resolvable:$true] %s201
          %207 = dma.hbm_to_vmem [thread:$0]  %s200, 8192, %s202, %s191, 128, 128, 8
        $region28: #{gemma2_mlp_fused.1} parent=19 // pred_fallthru
          _
      $region20: #{gemma2_mlp_fused.1} parent=5 // pred_fallthru
        _
      %p208 = scmp.le.s32.totalorder 1, %s14
      %p209 = scmp.lt.s32.totalorder %s14, 3
      %p210 = pnand %p208, %p209
      %p211 = pneg %p210
      // Predicated region
      $region29: #{gemma2_mlp_fused.1} parent=5 // pred_check
        _
      $region30: #{gemma2_mlp_fused.1} parent=5 // pred_check_branch
        %213 = sbr.rel (%p210) target = $region32
      $region31: #{gemma2_mlp_fused.1} parent=5 // pred_region
        %s214 = ssub.s32 %s14, 1
        // Predicated region
        $region33: #{gemma2_mlp_fused.1} parent=31 // pred_check
          %p215 = pneg %p52
        $region34: #{gemma2_mlp_fused.1} parent=31 // pred_check_branch
          %217 = sbr.rel (%p215) target = $region36
        $region35: #{gemma2_mlp_fused.1} parent=31 // pred_region
          %218 = dma.done [#allocation4], 512
        $region36: #{gemma2_mlp_fused.1} parent=31 // pred_fallthru
          _
        %s219 = sand.u32 %s19, 1
        %s220 = scalar_lea.sflag [#allocation7], %s219
        %s221 = sand.u32 %s65, 1
        %s222 = smul.addr %s221, 1024
        %s223 = scalar_lea.vmem [#allocation6], %s222
        // Predicated region
        $region37: #{gemma2_mlp_fused.1} parent=31 // pred_check
          %p224 = pneg %p78
        $region38: #{gemma2_mlp_fused.1} parent=31 // pred_check_branch
          %226 = sbr.rel (%p224) target = $region40
        $region39: #{gemma2_mlp_fused.1} parent=31 // pred_region
          %227 = dma.done %s220, 16384
        $region40: #{gemma2_mlp_fused.1} parent=31 // pred_fallthru
          _
        %s228 = sand.u32 %s19, 1
        %s229 = scalar_lea.sflag [#allocation7], %s228
        %s230 = sand.u32 %s91, 1
        %s231 = smul.addr %s230, 512
        %s232 = scalar_lea.vmem [#allocation8], %s231
        // Predicated region
        $region41: #{gemma2_mlp_fused.1} parent=31 // pred_check
          %p233 = pneg %p104
        $region42: #{gemma2_mlp_fused.1} parent=31 // pred_check_branch
          %235 = sbr.rel (%p233) target = $region44
        $region43: #{gemma2_mlp_fused.1} parent=31 // pred_region
          %236 = dma.done %s229, 8192
        $region44: #{gemma2_mlp_fused.1} parent=31 // pred_fallthru
          _
        %p237 = pneg %p52
        %p238 = pneg %p49
        %s239 = sand.u32 %s19, 1
        %s240 = scalar_lea.sflag [#allocation7], %s239
        %s241 = sand.u32 %s65, 1
        %s242 = smul.addr %s241, 1024
        %s243 = scalar_lea.vmem [#allocation6], %s242
        %p244 = pneg %p78
        %p245 = pneg %p75
        %s246 = sand.u32 %s19, 1
        %s247 = scalar_lea.sflag [#allocation7], %s246
        %s248 = sand.u32 %s91, 1
        %s249 = smul.addr %s248, 512
        %s250 = scalar_lea.vmem [#allocation8], %s249
        %p251 = pneg %p104
        %p252 = pneg %p101
        %p253 = pneg %p130
        %p254 = pneg %p127
        %s255 = smul.u32 2, %s23
        %s256 = smul.u32 2, %s23
        %p257 = scmp.eq.s32.totalorder %s24, 0
        // Predicated region
        $region45: #{gemma2_mlp_fused.1} parent=31 // pred_check
          %p258 = pneg %p257
        $region46: #{gemma2_mlp_fused.1} parent=31 // pred_check_branch
          %260 = sbr.rel (%p258) target = $region48
        $region47: #{gemma2_mlp_fused.1} parent=31 // pred_region
          %261 = vst [vmem:[#allocation2] sm:$0xff] 0.0
          %262 = vst [vmem:[#allocation2 + $0x8] sm:$0xff] 0.0
          %263 = vst [vmem:[#allocation2 + $0x10] sm:$0xff] 0.0
          %264 = vst [vmem:[#allocation2 + $0x18] sm:$0xff] 0.0
        $region48: #{gemma2_mlp_fused.1} parent=31 // pred_fallthru
          _
        %v265 = vld [vmem:[#allocation3] sm:$0xff]
        %v266 = vld [vmem:[#allocation3 + $0x8] sm:$0xff]
        %v267 = vld [vmem:[#allocation3 + $0x10] sm:$0xff]
        %v268 = vld [vmem:[#allocation3 + $0x18] sm:$0xff]
        %v269 = vpack.c.bf16 %v267, %v265
        %v270 = vpack.c.bf16 %v268, %v266
        %v271 = vld [vmem:[%s223] sm:$0xff]
        %v272 = vld [vmem:[%s223 + $0x8] sm:$0xff]
        %v273 = vld [vmem:[%s223 + $0x10] sm:$0xff]
        %v274 = vld [vmem:[%s223 + $0x18] sm:$0xff]
        %v275 = vld [vmem:[%s223 + $0x20] sm:$0xff]
        %v276 = vld [vmem:[%s223 + $0x28] sm:$0xff]
        %v277 = vld [vmem:[%s223 + $0x30] sm:$0xff]
        %v278 = vld [vmem:[%s223 + $0x38] sm:$0xff]
        %v279 = vld [vmem:[%s223 + $0x40] sm:$0xff]
        %v280 = vld [vmem:[%s223 + $0x48] sm:$0xff]
        %v281 = vld [vmem:[%s223 + $0x50] sm:$0xff]
        %v282 = vld [vmem:[%s223 + $0x58] sm:$0xff]
        %v283 = vld [vmem:[%s223 + $0x60] sm:$0xff]
        %v284 = vld [vmem:[%s223 + $0x68] sm:$0xff]
        %v285 = vld [vmem:[%s223 + $0x70] sm:$0xff]
        %v286 = vld [vmem:[%s223 + $0x78] sm:$0xff]
        %v287 = vld [vmem:[%s223 + $0x80] sm:$0xff]
        %v288 = vld [vmem:[%s223 + $0x88] sm:$0xff]
        %v289 = vld [vmem:[%s223 + $0x90] sm:$0xff]
        %v290 = vld [vmem:[%s223 + $0x98] sm:$0xff]
        %v291 = vld [vmem:[%s223 + $0xa0] sm:$0xff]
        %v292 = vld [vmem:[%s223 + $0xa8] sm:$0xff]
        %v293 = vld [vmem:[%s223 + $0xb0] sm:$0xff]
        %v294 = vld [vmem:[%s223 + $0xb8] sm:$0xff]
        %v295 = vld [vmem:[%s223 + $0xc0] sm:$0xff]
        %v296 = vld [vmem:[%s223 + $0xc8] sm:$0xff]
        %v297 = vld [vmem:[%s223 + $0xd0] sm:$0xff]
        %v298 = vld [vmem:[%s223 + $0xd8] sm:$0xff]
        %v299 = vld [vmem:[%s223 + $0xe0] sm:$0xff]
        %v300 = vld [vmem:[%s223 + $0xe8] sm:$0xff]
        %v301 = vld [vmem:[%s223 + $0xf0] sm:$0xff]
        %v302 = vld [vmem:[%s223 + $0xf8] sm:$0xff]
        %v303 = vld [vmem:[%s223 + $0x100] sm:$0xff]
        %v304 = vld [vmem:[%s223 + $0x108] sm:$0xff]
        %v305 = vld [vmem:[%s223 + $0x110] sm:$0xff]
        %v306 = vld [vmem:[%s223 + $0x118] sm:$0xff]
        %v307 = vld [vmem:[%s223 + $0x120] sm:$0xff]
        %v308 = vld [vmem:[%s223 + $0x128] sm:$0xff]
        %v309 = vld [vmem:[%s223 + $0x130] sm:$0xff]
        %v310 = vld [vmem:[%s223 + $0x138] sm:$0xff]
        %v311 = vld [vmem:[%s223 + $0x140] sm:$0xff]
        %v312 = vld [vmem:[%s223 + $0x148] sm:$0xff]
        %v313 = vld [vmem:[%s223 + $0x150] sm:$0xff]
        %v314 = vld [vmem:[%s223 + $0x158] sm:$0xff]
        %v315 = vld [vmem:[%s223 + $0x160] sm:$0xff]
        %v316 = vld [vmem:[%s223 + $0x168] sm:$0xff]
        %v317 = vld [vmem:[%s223 + $0x170] sm:$0xff]
        %v318 = vld [vmem:[%s223 + $0x178] sm:$0xff]
        %v319 = vld [vmem:[%s223 + $0x180] sm:$0xff]
        %v320 = vld [vmem:[%s223 + $0x188] sm:$0xff]
        %v321 = vld [vmem:[%s223 + $0x190] sm:$0xff]
        %v322 = vld [vmem:[%s223 + $0x198] sm:$0xff]
        %v323 = vld [vmem:[%s223 + $0x1a0] sm:$0xff]
        %v324 = vld [vmem:[%s223 + $0x1a8] sm:$0xff]
        %v325 = vld [vmem:[%s223 + $0x1b0] sm:$0xff]
        %v326 = vld [vmem:[%s223 + $0x1b8] sm:$0xff]
        %v327 = vld [vmem:[%s223 + $0x1c0] sm:$0xff]
        %v328 = vld [vmem:[%s223 + $0x1c8] sm:$0xff]
        %v329 = vld [vmem:[%s223 + $0x1d0] sm:$0xff]
        %v330 = vld [vmem:[%s223 + $0x1d8] sm:$0xff]
        %v331 = vld [vmem:[%s223 + $0x1e0] sm:$0xff]
        %v332 = vld [vmem:[%s223 + $0x1e8] sm:$0xff]
        %v333 = vld [vmem:[%s223 + $0x1f0] sm:$0xff]
        %v334 = vld [vmem:[%s223 + $0x1f8] sm:$0xff]
        %v335 = vld [vmem:[%s223 + $0x200] sm:$0xff]
        %v336 = vld [vmem:[%s223 + $0x208] sm:$0xff]
        %v337 = vld [vmem:[%s223 + $0x210] sm:$0xff]
        %v338 = vld [vmem:[%s223 + $0x218] sm:$0xff]
        %v339 = vld [vmem:[%s223 + $0x220] sm:$0xff]
        %v340 = vld [vmem:[%s223 + $0x228] sm:$0xff]
        %v341 = vld [vmem:[%s223 + $0x230] sm:$0xff]
        %v342 = vld [vmem:[%s223 + $0x238] sm:$0xff]
        %v343 = vld [vmem:[%s223 + $0x240] sm:$0xff]
        %v344 = vld [vmem:[%s223 + $0x248] sm:$0xff]
        %v345 = vld [vmem:[%s223 + $0x250] sm:$0xff]
        %v346 = vld [vmem:[%s223 + $0x258] sm:$0xff]
        %v347 = vld [vmem:[%s223 + $0x260] sm:$0xff]
        %v348 = vld [vmem:[%s223 + $0x268] sm:$0xff]
        %v349 = vld [vmem:[%s223 + $0x270] sm:$0xff]
        %v350 = vld [vmem:[%s223 + $0x278] sm:$0xff]
        %v351 = vld [vmem:[%s223 + $0x280] sm:$0xff]
        %v352 = vld [vmem:[%s223 + $0x288] sm:$0xff]
        %v353 = vld [vmem:[%s223 + $0x290] sm:$0xff]
        %v354 = vld [vmem:[%s223 + $0x298] sm:$0xff]
        %v355 = vld [vmem:[%s223 + $0x2a0] sm:$0xff]
        %v356 = vld [vmem:[%s223 + $0x2a8] sm:$0xff]
        %v357 = vld [vmem:[%s223 + $0x2b0] sm:$0xff]
        %v358 = vld [vmem:[%s223 + $0x2b8] sm:$0xff]
        %v359 = vld [vmem:[%s223 + $0x2c0] sm:$0xff]
        %v360 = vld [vmem:[%s223 + $0x2c8] sm:$0xff]
        %v361 = vld [vmem:[%s223 + $0x2d0] sm:$0xff]
        %v362 = vld [vmem:[%s223 + $0x2d8] sm:$0xff]
        %v363 = vld [vmem:[%s223 + $0x2e0] sm:$0xff]
        %v364 = vld [vmem:[%s223 + $0x2e8] sm:$0xff]
        %v365 = vld [vmem:[%s223 + $0x2f0] sm:$0xff]
        %v366 = vld [vmem:[%s223 + $0x2f8] sm:$0xff]
        %v367 = vld [vmem:[%s223 + $0x300] sm:$0xff]
        %v368 = vld [vmem:[%s223 + $0x308] sm:$0xff]
        %v369 = vld [vmem:[%s223 + $0x310] sm:$0xff]
        %v370 = vld [vmem:[%s223 + $0x318] sm:$0xff]
        %v371 = vld [vmem:[%s223 + $0x320] sm:$0xff]
        %v372 = vld [vmem:[%s223 + $0x328] sm:$0xff]
        %v373 = vld [vmem:[%s223 + $0x330] sm:$0xff]
        %v374 = vld [vmem:[%s223 + $0x338] sm:$0xff]
        %v375 = vld [vmem:[%s223 + $0x340] sm:$0xff]
        %v376 = vld [vmem:[%s223 + $0x348] sm:$0xff]
        %v377 = vld [vmem:[%s223 + $0x350] sm:$0xff]
        %v378 = vld [vmem:[%s223 + $0x358] sm:$0xff]
        %v379 = vld [vmem:[%s223 + $0x360] sm:$0xff]
        %v380 = vld [vmem:[%s223 + $0x368] sm:$0xff]
        %v381 = vld [vmem:[%s223 + $0x370] sm:$0xff]
        %v382 = vld [vmem:[%s223 + $0x378] sm:$0xff]
        %v383 = vld [vmem:[%s223 + $0x380] sm:$0xff]
        %v384 = vld [vmem:[%s223 + $0x388] sm:$0xff]
        %v385 = vld [vmem:[%s223 + $0x390] sm:$0xff]
        %v386 = vld [vmem:[%s223 + $0x398] sm:$0xff]
        %v387 = vld [vmem:[%s223 + $0x3a0] sm:$0xff]
        %v388 = vld [vmem:[%s223 + $0x3a8] sm:$0xff]
        %v389 = vld [vmem:[%s223 + $0x3b0] sm:$0xff]
        %v390 = vld [vmem:[%s223 + $0x3b8] sm:$0xff]
        %v391 = vld [vmem:[%s223 + $0x3c0] sm:$0xff]
        %v392 = vld [vmem:[%s223 + $0x3c8] sm:$0xff]
        %v393 = vld [vmem:[%s223 + $0x3d0] sm:$0xff]
        %v394 = vld [vmem:[%s223 + $0x3d8] sm:$0xff]
        %v395 = vld [vmem:[%s223 + $0x3e0] sm:$0xff]
        %v396 = vld [vmem:[%s223 + $0x3e8] sm:$0xff]
        %v397 = vld [vmem:[%s223 + $0x3f0] sm:$0xff]
        %v398 = vld [vmem:[%s223 + $0x3f8] sm:$0xff]
        %v527 = vunpack.c.l.b16 %v271
        %v528 = vunpack.c.h.b16 %v271
        %v529 = vunpack.c.l.b16 %v272
        %v530 = vunpack.c.h.b16 %v272
        %v531 = vunpack.c.l.b16 %v273
        %v532 = vunpack.c.h.b16 %v273
        %v533 = vunpack.c.l.b16 %v274
        %v534 = vunpack.c.h.b16 %v274
        %v535 = vunpack.c.l.b16 %v275
        %v536 = vunpack.c.h.b16 %v275
        %v537 = vunpack.c.l.b16 %v276
        %v538 = vunpack.c.h.b16 %v276
        %v539 = vunpack.c.l.b16 %v277
        %v540 = vunpack.c.h.b16 %v277
        %v541 = vunpack.c.l.b16 %v278
        %v542 = vunpack.c.h.b16 %v278
        %v543 = vunpack.c.l.b16 %v279
        %v544 = vunpack.c.h.b16 %v279
        %v545 = vunpack.c.l.b16 %v280
        %v546 = vunpack.c.h.b16 %v280
        %v547 = vunpack.c.l.b16 %v281
        %v548 = vunpack.c.h.b16 %v281
        %v549 = vunpack.c.l.b16 %v282
        %v550 = vunpack.c.h.b16 %v282
        %v551 = vunpack.c.l.b16 %v283
        %v552 = vunpack.c.h.b16 %v283
        %v553 = vunpack.c.l.b16 %v284
        %v554 = vunpack.c.h.b16 %v284
        %v555 = vunpack.c.l.b16 %v285
        %v556 = vunpack.c.h.b16 %v285
        %v557 = vunpack.c.l.b16 %v286
        %v558 = vunpack.c.h.b16 %v286
        %v559 = vunpack.c.l.b16 %v287
        %v560 = vunpack.c.h.b16 %v287
        %v561 = vunpack.c.l.b16 %v288
        %v562 = vunpack.c.h.b16 %v288
        %v563 = vunpack.c.l.b16 %v289
        %v564 = vunpack.c.h.b16 %v289
        %v565 = vunpack.c.l.b16 %v290
        %v566 = vunpack.c.h.b16 %v290
        %v567 = vunpack.c.l.b16 %v291
        %v568 = vunpack.c.h.b16 %v291
        %v569 = vunpack.c.l.b16 %v292
        %v570 = vunpack.c.h.b16 %v292
        %v571 = vunpack.c.l.b16 %v293
        %v572 = vunpack.c.h.b16 %v293
        %v573 = vunpack.c.l.b16 %v294
        %v574 = vunpack.c.h.b16 %v294
        %v575 = vunpack.c.l.b16 %v295
        %v576 = vunpack.c.h.b16 %v295
        %v577 = vunpack.c.l.b16 %v296
        %v578 = vunpack.c.h.b16 %v296
        %v579 = vunpack.c.l.b16 %v297
        %v580 = vunpack.c.h.b16 %v297
        %v581 = vunpack.c.l.b16 %v298
        %v582 = vunpack.c.h.b16 %v298
        %v583 = vunpack.c.l.b16 %v299
        %v584 = vunpack.c.h.b16 %v299
        %v585 = vunpack.c.l.b16 %v300
        %v586 = vunpack.c.h.b16 %v300
        %v587 = vunpack.c.l.b16 %v301
        %v588 = vunpack.c.h.b16 %v301
        %v589 = vunpack.c.l.b16 %v302
        %v590 = vunpack.c.h.b16 %v302
        %v591 = vunpack.c.l.b16 %v303
        %v592 = vunpack.c.h.b16 %v303
        %v593 = vunpack.c.l.b16 %v304
        %v594 = vunpack.c.h.b16 %v304
        %v595 = vunpack.c.l.b16 %v305
        %v596 = vunpack.c.h.b16 %v305
        %v597 = vunpack.c.l.b16 %v306
        %v598 = vunpack.c.h.b16 %v306
        %v599 = vunpack.c.l.b16 %v307
        %v600 = vunpack.c.h.b16 %v307
        %v601 = vunpack.c.l.b16 %v308
        %v602 = vunpack.c.h.b16 %v308
        %v603 = vunpack.c.l.b16 %v309
        %v604 = vunpack.c.h.b16 %v309
        %v605 = vunpack.c.l.b16 %v310
        %v606 = vunpack.c.h.b16 %v310
        %v607 = vunpack.c.l.b16 %v311
        %v608 = vunpack.c.h.b16 %v311
        %v609 = vunpack.c.l.b16 %v312
        %v610 = vunpack.c.h.b16 %v312
        %v611 = vunpack.c.l.b16 %v313
        %v612 = vunpack.c.h.b16 %v313
        %v613 = vunpack.c.l.b16 %v314
        %v614 = vunpack.c.h.b16 %v314
        %v615 = vunpack.c.l.b16 %v315
        %v616 = vunpack.c.h.b16 %v315
        %v617 = vunpack.c.l.b16 %v316
        %v618 = vunpack.c.h.b16 %v316
        %v619 = vunpack.c.l.b16 %v317
        %v620 = vunpack.c.h.b16 %v317
        %v621 = vunpack.c.l.b16 %v318
        %v622 = vunpack.c.h.b16 %v318
        %v623 = vunpack.c.l.b16 %v319
        %v624 = vunpack.c.h.b16 %v319
        %v625 = vunpack.c.l.b16 %v320
        %v626 = vunpack.c.h.b16 %v320
        %v627 = vunpack.c.l.b16 %v321
        %v628 = vunpack.c.h.b16 %v321
        %v629 = vunpack.c.l.b16 %v322
        %v630 = vunpack.c.h.b16 %v322
        %v631 = vunpack.c.l.b16 %v323
        %v632 = vunpack.c.h.b16 %v323
        %v633 = vunpack.c.l.b16 %v324
        %v634 = vunpack.c.h.b16 %v324
        %v635 = vunpack.c.l.b16 %v325
        %v636 = vunpack.c.h.b16 %v325
        %v637 = vunpack.c.l.b16 %v326
        %v638 = vunpack.c.h.b16 %v326
        %v639 = vunpack.c.l.b16 %v327
        %v640 = vunpack.c.h.b16 %v327
        %v641 = vunpack.c.l.b16 %v328
        %v642 = vunpack.c.h.b16 %v328
        %v643 = vunpack.c.l.b16 %v329
        %v644 = vunpack.c.h.b16 %v329
        %v645 = vunpack.c.l.b16 %v330
        %v646 = vunpack.c.h.b16 %v330
        %v647 = vunpack.c.l.b16 %v331
        %v648 = vunpack.c.h.b16 %v331
        %v649 = vunpack.c.l.b16 %v332
        %v650 = vunpack.c.h.b16 %v332
        %v651 = vunpack.c.l.b16 %v333
        %v652 = vunpack.c.h.b16 %v333
        %v653 = vunpack.c.l.b16 %v334
        %v654 = vunpack.c.h.b16 %v334
        %v655 = vunpack.c.l.b16 %v335
        %v656 = vunpack.c.h.b16 %v335
        %v657 = vunpack.c.l.b16 %v336
        %v658 = vunpack.c.h.b16 %v336
        %v659 = vunpack.c.l.b16 %v337
        %v660 = vunpack.c.h.b16 %v337
        %v661 = vunpack.c.l.b16 %v338
        %v662 = vunpack.c.h.b16 %v338
        %v663 = vunpack.c.l.b16 %v339
        %v664 = vunpack.c.h.b16 %v339
        %v665 = vunpack.c.l.b16 %v340
        %v666 = vunpack.c.h.b16 %v340
        %v667 = vunpack.c.l.b16 %v341
        %v668 = vunpack.c.h.b16 %v341
        %v669 = vunpack.c.l.b16 %v342
        %v670 = vunpack.c.h.b16 %v342
        %v671 = vunpack.c.l.b16 %v343
        %v672 = vunpack.c.h.b16 %v343
        %v673 = vunpack.c.l.b16 %v344
        %v674 = vunpack.c.h.b16 %v344
        %v675 = vunpack.c.l.b16 %v345
        %v676 = vunpack.c.h.b16 %v345
        %v677 = vunpack.c.l.b16 %v346
        %v678 = vunpack.c.h.b16 %v346
        %v679 = vunpack.c.l.b16 %v347
        %v680 = vunpack.c.h.b16 %v347
        %v681 = vunpack.c.l.b16 %v348
        %v682 = vunpack.c.h.b16 %v348
        %v683 = vunpack.c.l.b16 %v349
        %v684 = vunpack.c.h.b16 %v349
        %v685 = vunpack.c.l.b16 %v350
        %v686 = vunpack.c.h.b16 %v350
        %v687 = vunpack.c.l.b16 %v351
        %v688 = vunpack.c.h.b16 %v351
        %v689 = vunpack.c.l.b16 %v352
        %v690 = vunpack.c.h.b16 %v352
        %v691 = vunpack.c.l.b16 %v353
        %v692 = vunpack.c.h.b16 %v353
        %v693 = vunpack.c.l.b16 %v354
        %v694 = vunpack.c.h.b16 %v354
        %v695 = vunpack.c.l.b16 %v355
        %v696 = vunpack.c.h.b16 %v355
        %v697 = vunpack.c.l.b16 %v356
        %v698 = vunpack.c.h.b16 %v356
        %v699 = vunpack.c.l.b16 %v357
        %v700 = vunpack.c.h.b16 %v357
        %v701 = vunpack.c.l.b16 %v358
        %v702 = vunpack.c.h.b16 %v358
        %v703 = vunpack.c.l.b16 %v359
        %v704 = vunpack.c.h.b16 %v359
        %v705 = vunpack.c.l.b16 %v360
        %v706 = vunpack.c.h.b16 %v360
        %v707 = vunpack.c.l.b16 %v361
        %v708 = vunpack.c.h.b16 %v361
        %v709 = vunpack.c.l.b16 %v362
        %v710 = vunpack.c.h.b16 %v362
        %v711 = vunpack.c.l.b16 %v363
        %v712 = vunpack.c.h.b16 %v363
        %v713 = vunpack.c.l.b16 %v364
        %v714 = vunpack.c.h.b16 %v364
        %v715 = vunpack.c.l.b16 %v365
        %v716 = vunpack.c.h.b16 %v365
        %v717 = vunpack.c.l.b16 %v366
        %v718 = vunpack.c.h.b16 %v366
        %v719 = vunpack.c.l.b16 %v367
        %v720 = vunpack.c.h.b16 %v367
        %v721 = vunpack.c.l.b16 %v368
        %v722 = vunpack.c.h.b16 %v368
        %v723 = vunpack.c.l.b16 %v369
        %v724 = vunpack.c.h.b16 %v369
        %v725 = vunpack.c.l.b16 %v370
        %v726 = vunpack.c.h.b16 %v370
        %v727 = vunpack.c.l.b16 %v371
        %v728 = vunpack.c.h.b16 %v371
        %v729 = vunpack.c.l.b16 %v372
        %v730 = vunpack.c.h.b16 %v372
        %v731 = vunpack.c.l.b16 %v373
        %v732 = vunpack.c.h.b16 %v373
        %v733 = vunpack.c.l.b16 %v374
        %v734 = vunpack.c.h.b16 %v374
        %v735 = vunpack.c.l.b16 %v375
        %v736 = vunpack.c.h.b16 %v375
        %v737 = vunpack.c.l.b16 %v376
        %v738 = vunpack.c.h.b16 %v376
        %v739 = vunpack.c.l.b16 %v377
        %v740 = vunpack.c.h.b16 %v377
        %v741 = vunpack.c.l.b16 %v378
        %v742 = vunpack.c.h.b16 %v378
        %v743 = vunpack.c.l.b16 %v379
        %v744 = vunpack.c.h.b16 %v379
        %v745 = vunpack.c.l.b16 %v380
        %v746 = vunpack.c.h.b16 %v380
        %v747 = vunpack.c.l.b16 %v381
        %v748 = vunpack.c.h.b16 %v381
        %v749 = vunpack.c.l.b16 %v382
        %v750 = vunpack.c.h.b16 %v382
        %v751 = vunpack.c.l.b16 %v383
        %v752 = vunpack.c.h.b16 %v383
        %v753 = vunpack.c.l.b16 %v384
        %v754 = vunpack.c.h.b16 %v384
        %v755 = vunpack.c.l.b16 %v385
        %v756 = vunpack.c.h.b16 %v385
        %v757 = vunpack.c.l.b16 %v386
        %v758 = vunpack.c.h.b16 %v386
        %v759 = vunpack.c.l.b16 %v387
        %v760 = vunpack.c.h.b16 %v387
        %v761 = vunpack.c.l.b16 %v388
        %v762 = vunpack.c.h.b16 %v388
        %v763 = vunpack.c.l.b16 %v389
        %v764 = vunpack.c.h.b16 %v389
        %v765 = vunpack.c.l.b16 %v390
        %v766 = vunpack.c.h.b16 %v390
        %v767 = vunpack.c.l.b16 %v391
        %v768 = vunpack.c.h.b16 %v391
        %v769 = vunpack.c.l.b16 %v392
        %v770 = vunpack.c.h.b16 %v392
        %v771 = vunpack.c.l.b16 %v393
        %v772 = vunpack.c.h.b16 %v393
        %v773 = vunpack.c.l.b16 %v394
        %v774 = vunpack.c.h.b16 %v394
        %v775 = vunpack.c.l.b16 %v395
        %v776 = vunpack.c.h.b16 %v395
        %v777 = vunpack.c.l.b16 %v396
        %v778 = vunpack.c.h.b16 %v396
        %v779 = vunpack.c.l.b16 %v397
        %v780 = vunpack.c.h.b16 %v397
        %v781 = vunpack.c.l.b16 %v398
        %v782 = vunpack.c.h.b16 %v398
        %v783 = vpack.c.b16 %v535, %v527
        %v784 = vpack.c.b16 %v536, %v528
        %v785 = vpack.c.b16 %v537, %v529
        %v786 = vpack.c.b16 %v538, %v530
        %v787 = vpack.c.b16 %v539, %v531
        %v788 = vpack.c.b16 %v540, %v532
        %v789 = vpack.c.b16 %v541, %v533
        %v790 = vpack.c.b16 %v542, %v534
        %v791 = vpack.c.b16 %v551, %v543
        %v792 = vpack.c.b16 %v552, %v544
        %v793 = vpack.c.b16 %v553, %v545
        %v794 = vpack.c.b16 %v554, %v546
        %v795 = vpack.c.b16 %v555, %v547
        %v796 = vpack.c.b16 %v556, %v548
        %v797 = vpack.c.b16 %v557, %v549
        %v798 = vpack.c.b16 %v558, %v550
        %v799 = vpack.c.b16 %v567, %v559
        %v800 = vpack.c.b16 %v568, %v560
        %v801 = vpack.c.b16 %v569, %v561
        %v802 = vpack.c.b16 %v570, %v562
        %v803 = vpack.c.b16 %v571, %v563
        %v804 = vpack.c.b16 %v572, %v564
        %v805 = vpack.c.b16 %v573, %v565
        %v806 = vpack.c.b16 %v574, %v566
        %v807 = vpack.c.b16 %v583, %v575
        %v808 = vpack.c.b16 %v584, %v576
        %v809 = vpack.c.b16 %v585, %v577
        %v810 = vpack.c.b16 %v586, %v578
        %v811 = vpack.c.b16 %v587, %v579
        %v812 = vpack.c.b16 %v588, %v580
        %v813 = vpack.c.b16 %v589, %v581
        %v814 = vpack.c.b16 %v590, %v582
        %v815 = vpack.c.b16 %v599, %v591
        %v816 = vpack.c.b16 %v600, %v592
        %v817 = vpack.c.b16 %v601, %v593
        %v818 = vpack.c.b16 %v602, %v594
        %v819 = vpack.c.b16 %v603, %v595
        %v820 = vpack.c.b16 %v604, %v596
        %v821 = vpack.c.b16 %v605, %v597
        %v822 = vpack.c.b16 %v606, %v598
        %v823 = vpack.c.b16 %v615, %v607
        %v824 = vpack.c.b16 %v616, %v608
        %v825 = vpack.c.b16 %v617, %v609
        %v826 = vpack.c.b16 %v618, %v610
        %v827 = vpack.c.b16 %v619, %v611
        %v828 = vpack.c.b16 %v620, %v612
        %v829 = vpack.c.b16 %v621, %v613
        %v830 = vpack.c.b16 %v622, %v614
        %v831 = vpack.c.b16 %v631, %v623
        %v832 = vpack.c.b16 %v632, %v624
        %v833 = vpack.c.b16 %v633, %v625
        %v834 = vpack.c.b16 %v634, %v626
        %v835 = vpack.c.b16 %v635, %v627
        %v836 = vpack.c.b16 %v636, %v628
        %v837 = vpack.c.b16 %v637, %v629
        %v838 = vpack.c.b16 %v638, %v630
        %v839 = vpack.c.b16 %v647, %v639
        %v840 = vpack.c.b16 %v648, %v640
        %v841 = vpack.c.b16 %v649, %v641
        %v842 = vpack.c.b16 %v650, %v642
        %v843 = vpack.c.b16 %v651, %v643
        %v844 = vpack.c.b16 %v652, %v644
        %v845 = vpack.c.b16 %v653, %v645
        %v846 = vpack.c.b16 %v654, %v646
        %v847 = vpack.c.b16 %v663, %v655
        %v848 = vpack.c.b16 %v664, %v656
        %v849 = vpack.c.b16 %v665, %v657
        %v850 = vpack.c.b16 %v666, %v658
        %v851 = vpack.c.b16 %v667, %v659
        %v852 = vpack.c.b16 %v668, %v660
        %v853 = vpack.c.b16 %v669, %v661
        %v854 = vpack.c.b16 %v670, %v662
        %v855 = vpack.c.b16 %v679, %v671
        %v856 = vpack.c.b16 %v680, %v672
        %v857 = vpack.c.b16 %v681, %v673
        %v858 = vpack.c.b16 %v682, %v674
        %v859 = vpack.c.b16 %v683, %v675
        %v860 = vpack.c.b16 %v684, %v676
        %v861 = vpack.c.b16 %v685, %v677
        %v862 = vpack.c.b16 %v686, %v678
        %v863 = vpack.c.b16 %v695, %v687
        %v864 = vpack.c.b16 %v696, %v688
        %v865 = vpack.c.b16 %v697, %v689
        %v866 = vpack.c.b16 %v698, %v690
        %v867 = vpack.c.b16 %v699, %v691
        %v868 = vpack.c.b16 %v700, %v692
        %v869 = vpack.c.b16 %v701, %v693
        %v870 = vpack.c.b16 %v702, %v694
        %v871 = vpack.c.b16 %v711, %v703
        %v872 = vpack.c.b16 %v712, %v704
        %v873 = vpack.c.b16 %v713, %v705
        %v874 = vpack.c.b16 %v714, %v706
        %v875 = vpack.c.b16 %v715, %v707
        %v876 = vpack.c.b16 %v716, %v708
        %v877 = vpack.c.b16 %v717, %v709
        %v878 = vpack.c.b16 %v718, %v710
        %v879 = vpack.c.b16 %v727, %v719
        %v880 = vpack.c.b16 %v728, %v720
        %v881 = vpack.c.b16 %v729, %v721
        %v882 = vpack.c.b16 %v730, %v722
        %v883 = vpack.c.b16 %v731, %v723
        %v884 = vpack.c.b16 %v732, %v724
        %v885 = vpack.c.b16 %v733, %v725
        %v886 = vpack.c.b16 %v734, %v726
        %v887 = vpack.c.b16 %v743, %v735
        %v888 = vpack.c.b16 %v744, %v736
        %v889 = vpack.c.b16 %v745, %v737
        %v890 = vpack.c.b16 %v746, %v738
        %v891 = vpack.c.b16 %v747, %v739
        %v892 = vpack.c.b16 %v748, %v740
        %v893 = vpack.c.b16 %v749, %v741
        %v894 = vpack.c.b16 %v750, %v742
        %v895 = vpack.c.b16 %v759, %v751
        %v896 = vpack.c.b16 %v760, %v752
        %v897 = vpack.c.b16 %v761, %v753
        %v898 = vpack.c.b16 %v762, %v754
        %v899 = vpack.c.b16 %v763, %v755
        %v900 = vpack.c.b16 %v764, %v756
        %v901 = vpack.c.b16 %v765, %v757
        %v902 = vpack.c.b16 %v766, %v758
        %v903 = vpack.c.b16 %v775, %v767
        %v904 = vpack.c.b16 %v776, %v768
        %v905 = vpack.c.b16 %v777, %v769
        %v906 = vpack.c.b16 %v778, %v770
        %v907 = vpack.c.b16 %v779, %v771
        %v908 = vpack.c.b16 %v780, %v772
        %v909 = vpack.c.b16 %v781, %v773
        %v910 = vpack.c.b16 %v782, %v774
        %1039 = vmatprep.subr.bf16.mxu0 %v784
        %1040 = vmatpush1.bf16.msra.mxu0 %v783
        %1041 = vmatprep.subr.bf16.mxu0 %v792
        %1042 = vmatpush1.bf16.msra.mxu0 %v791
        %1043 = vmatprep.subr.bf16.mxu0 %v800
        %1044 = vmatpush1.bf16.msra.mxu0 %v799
        %1045 = vmatprep.subr.bf16.mxu0 %v808
        %1046 = vmatpush1.bf16.msra.mxu0 %v807
        %1047 = vmatprep.subr.bf16.mxu0 %v816
        %1048 = vmatpush1.bf16.msra.mxu0 %v815
        %1049 = vmatprep.subr.bf16.mxu0 %v824
        %1050 = vmatpush1.bf16.msra.mxu0 %v823
        %1051 = vmatprep.subr.bf16.mxu0 %v832
        %1052 = vmatpush1.bf16.msra.mxu0 %v831
        %1053 = vmatprep.subr.bf16.mxu0 %v840
        %1054 = vmatpush1.bf16.msra.mxu0 %v839
        %1055 = vmatprep.subr.bf16.mxu0 %v848
        %1056 = vmatpush1.bf16.msra.mxu0 %v847
        %1057 = vmatprep.subr.bf16.mxu0 %v856
        %1058 = vmatpush1.bf16.msra.mxu0 %v855
        %1059 = vmatprep.subr.bf16.mxu0 %v864
        %1060 = vmatpush1.bf16.msra.mxu0 %v863
        %1061 = vmatprep.subr.bf16.mxu0 %v872
        %1062 = vmatpush1.bf16.msra.mxu0 %v871
        %1063 = vmatprep.subr.bf16.mxu0 %v880
        %1064 = vmatpush1.bf16.msra.mxu0 %v879
        %1065 = vmatprep.subr.bf16.mxu0 %v888
        %1066 = vmatpush1.bf16.msra.mxu0 %v887
        %1067 = vmatprep.subr.bf16.mxu0 %v896
        %1068 = vmatpush1.bf16.msra.mxu0 %v895
        %1069 = vmatprep.subr.bf16.mxu0 %v904
        %1070 = vmatpush1.bf16.msra.mxu0 %v903
        %1071 = vmatprep.mubr.bf16.mxu0 %v270
        %1072 = vmatmul.mubr.bf16.gmra.mrb[0].mxu0 %v269
        %v1073 = vpop.f32.mrb[0].mxu0
        %v1074 = vadd.f32 0.0, %v1073
        %v1075 = vpop.f32.mrb[0].mxu0
        %v1076 = vadd.f32 0.0, %v1075
        %v1077 = vpop.f32.mrb[0].mxu0
        %v1078 = vadd.f32 0.0, %v1077
        %v1079 = vpop.f32.mrb[0].mxu0
        %v1080 = vadd.f32 0.0, %v1079
        %1081 = vdwg.mxu0
        %1082 = vmatprep.subr.bf16.mxu0 %v786
        %1083 = vmatpush1.bf16.msra.mxu0 %v785
        %1084 = vmatprep.subr.bf16.mxu0 %v794
        %1085 = vmatpush1.bf16.msra.mxu0 %v793
        %1086 = vmatprep.subr.bf16.mxu0 %v802
        %1087 = vmatpush1.bf16.msra.mxu0 %v801
        %1088 = vmatprep.subr.bf16.mxu0 %v810
        %1089 = vmatpush1.bf16.msra.mxu0 %v809
        %1090 = vmatprep.subr.bf16.mxu0 %v818
        %1091 = vmatpush1.bf16.msra.mxu0 %v817
        %1092 = vmatprep.subr.bf16.mxu0 %v826
        %1093 = vmatpush1.bf16.msra.mxu0 %v825
        %1094 = vmatprep.subr.bf16.mxu0 %v834
        %1095 = vmatpush1.bf16.msra.mxu0 %v833
        %1096 = vmatprep.subr.bf16.mxu0 %v842
        %1097 = vmatpush1.bf16.msra.mxu0 %v841
        %1098 = vmatprep.subr.bf16.mxu0 %v850
        %1099 = vmatpush1.bf16.msra.mxu0 %v849
        %1100 = vmatprep.subr.bf16.mxu0 %v858
        %1101 = vmatpush1.bf16.msra.mxu0 %v857
        %1102 = vmatprep.subr.bf16.mxu0 %v866
        %1103 = vmatpush1.bf16.msra.mxu0 %v865
        %1104 = vmatprep.subr.bf16.mxu0 %v874
        %1105 = vmatpush1.bf16.msra.mxu0 %v873
        %1106 = vmatprep.subr.bf16.mxu0 %v882
        %1107 = vmatpush1.bf16.msra.mxu0 %v881
        %1108 = vmatprep.subr.bf16.mxu0 %v890
        %1109 = vmatpush1.bf16.msra.mxu0 %v889
        %1110 = vmatprep.subr.bf16.mxu0 %v898
        %1111 = vmatpush1.bf16.msra.mxu0 %v897
        %1112 = vmatprep.subr.bf16.mxu0 %v906
        %1113 = vmatpush1.bf16.msra.mxu0 %v905
        %1114 = vmatprep.mubr.bf16.mxu0 %v270
        %1115 = vmatmul.mubr.bf16.gmra.mrb[0].mxu0 %v269
        %v1116 = vpop.f32.mrb[0].mxu0
        %v1117 = vadd.f32 0.0, %v1116
        %v1118 = vpop.f32.mrb[0].mxu0
        %v1119 = vadd.f32 0.0, %v1118
        %v1120 = vpop.f32.mrb[0].mxu0
        %v1121 = vadd.f32 0.0, %v1120
        %v1122 = vpop.f32.mrb[0].mxu0
        %v1123 = vadd.f32 0.0, %v1122
        %1124 = vdwg.mxu0
        %1125 = vmatprep.subr.bf16.mxu0 %v788
        %1126 = vmatpush1.bf16.msra.mxu0 %v787
        %1127 = vmatprep.subr.bf16.mxu0 %v796
        %1128 = vmatpush1.bf16.msra.mxu0 %v795
        %1129 = vmatprep.subr.bf16.mxu0 %v804
        %1130 = vmatpush1.bf16.msra.mxu0 %v803
        %1131 = vmatprep.subr.bf16.mxu0 %v812
        %1132 = vmatpush1.bf16.msra.mxu0 %v811
        %1133 = vmatprep.subr.bf16.mxu0 %v820
        %1134 = vmatpush1.bf16.msra.mxu0 %v819
        %1135 = vmatprep.subr.bf16.mxu0 %v828
        %1136 = vmatpush1.bf16.msra.mxu0 %v827
        %1137 = vmatprep.subr.bf16.mxu0 %v836
        %1138 = vmatpush1.bf16.msra.mxu0 %v835
        %1139 = vmatprep.subr.bf16.mxu0 %v844
        %1140 = vmatpush1.bf16.msra.mxu0 %v843
        %1141 = vmatprep.subr.bf16.mxu0 %v852
        %1142 = vmatpush1.bf16.msra.mxu0 %v851
        %1143 = vmatprep.subr.bf16.mxu0 %v860
        %1144 = vmatpush1.bf16.msra.mxu0 %v859
        %1145 = vmatprep.subr.bf16.mxu0 %v868
        %1146 = vmatpush1.bf16.msra.mxu0 %v867
        %1147 = vmatprep.subr.bf16.mxu0 %v876
        %1148 = vmatpush1.bf16.msra.mxu0 %v875
        %1149 = vmatprep.subr.bf16.mxu0 %v884
        %1150 = vmatpush1.bf16.msra.mxu0 %v883
        %1151 = vmatprep.subr.bf16.mxu0 %v892
        %1152 = vmatpush1.bf16.msra.mxu0 %v891
        %1153 = vmatprep.subr.bf16.mxu0 %v900
        %1154 = vmatpush1.bf16.msra.mxu0 %v899
        %1155 = vmatprep.subr.bf16.mxu0 %v908
        %1156 = vmatpush1.bf16.msra.mxu0 %v907
        %1157 = vmatprep.mubr.bf16.mxu0 %v270
        %1158 = vmatmul.mubr.bf16.gmra.mrb[0].mxu0 %v269
        %v1159 = vpop.f32.mrb[0].mxu0
        %v1160 = vadd.f32 0.0, %v1159
        %v1161 = vpop.f32.mrb[0].mxu0
        %v1162 = vadd.f32 0.0, %v1161
        %v1163 = vpop.f32.mrb[0].mxu0
        %v1164 = vadd.f32 0.0, %v1163
        %v1165 = vpop.f32.mrb[0].mxu0
        %v1166 = vadd.f32 0.0, %v1165
        %1167 = vdwg.mxu0
        %1168 = vmatprep.subr.bf16.mxu0 %v790
        %1169 = vmatpush1.bf16.msra.mxu0 %v789
        %1170 = vmatprep.subr.bf16.mxu0 %v798
        %1171 = vmatpush1.bf16.msra.mxu0 %v797
        %1172 = vmatprep.subr.bf16.mxu0 %v806
        %1173 = vmatpush1.bf16.msra.mxu0 %v805
        %1174 = vmatprep.subr.bf16.mxu0 %v814
        %1175 = vmatpush1.bf16.msra.mxu0 %v813
        %1176 = vmatprep.subr.bf16.mxu0 %v822
        %1177 = vmatpush1.bf16.msra.mxu0 %v821
        %1178 = vmatprep.subr.bf16.mxu0 %v830
        %1179 = vmatpush1.bf16.msra.mxu0 %v829
        %1180 = vmatprep.subr.bf16.mxu0 %v838
        %1181 = vmatpush1.bf16.msra.mxu0 %v837
        %1182 = vmatprep.subr.bf16.mxu0 %v846
        %1183 = vmatpush1.bf16.msra.mxu0 %v845
        %1184 = vmatprep.subr.bf16.mxu0 %v854
        %1185 = vmatpush1.bf16.msra.mxu0 %v853
        %1186 = vmatprep.subr.bf16.mxu0 %v862
        %1187 = vmatpush1.bf16.msra.mxu0 %v861
        %1188 = vmatprep.subr.bf16.mxu0 %v870
        %1189 = vmatpush1.bf16.msra.mxu0 %v869
        %1190 = vmatprep.subr.bf16.mxu0 %v878
        %1191 = vmatpush1.bf16.msra.mxu0 %v877
        %1192 = vmatprep.subr.bf16.mxu0 %v886
        %1193 = vmatpush1.bf16.msra.mxu0 %v885
        %1194 = vmatprep.subr.bf16.mxu0 %v894
        %1195 = vmatpush1.bf16.msra.mxu0 %v893
        %1196 = vmatprep.subr.bf16.mxu0 %v902
        %1197 = vmatpush1.bf16.msra.mxu0 %v901
        %1198 = vmatprep.subr.bf16.mxu0 %v910
        %1199 = vmatpush1.bf16.msra.mxu0 %v909
        %1200 = vmatprep.mubr.bf16.mxu0 %v270
        %1201 = vmatmul.mubr.bf16.gmra.mrb[0].mxu0 %v269
        %v1202 = vpop.f32.mrb[0].mxu0
        %v1203 = vadd.f32 0.0, %v1202
        %v1204 = vpop.f32.mrb[0].mxu0
        %v1205 = vadd.f32 0.0, %v1204
        %v1206 = vpop.f32.mrb[0].mxu0
        %v1207 = vadd.f32 0.0, %v1206
        %v1208 = vpop.f32.mrb[0].mxu0
        %v1209 = vadd.f32 0.0, %v1208
        %1210 = vdwg.mxu0
        %v1211 = vmul.f32 %v1074, %v1074
        %v1212 = vmul.f32 %v1076, %v1076
        %v1213 = vmul.f32 %v1117, %v1117
        %v1214 = vmul.f32 %v1119, %v1119
        %v1215 = vmul.f32 %v1078, %v1078
        %v1216 = vmul.f32 %v1080, %v1080
        %v1217 = vmul.f32 %v1121, %v1121
        %v1218 = vmul.f32 %v1123, %v1123
        %v1219 = vmul.f32 %v1074, %v1211
        %v1220 = vmul.f32 %v1076, %v1212
        %v1221 = vmul.f32 %v1117, %v1213
        %v1222 = vmul.f32 %v1119, %v1214
        %v1223 = vmul.f32 %v1078, %v1215
        %v1224 = vmul.f32 %v1080, %v1216
        %v1225 = vmul.f32 %v1121, %v1217
        %v1226 = vmul.f32 %v1123, %v1218
        %v1227 = vmul.f32 %v1219, 0.044715
        %v1228 = vmul.f32 %v1220, 0.044715
        %v1229 = vmul.f32 %v1221, 0.044715
        %v1230 = vmul.f32 %v1222, 0.044715
        %v1231 = vmul.f32 %v1223, 0.044715
        %v1232 = vmul.f32 %v1224, 0.044715
        %v1233 = vmul.f32 %v1225, 0.044715
        %v1234 = vmul.f32 %v1226, 0.044715
        %v1235 = vadd.f32 %v1074, %v1227
        %v1236 = vadd.f32 %v1076, %v1228
        %v1237 = vadd.f32 %v1117, %v1229
        %v1238 = vadd.f32 %v1119, %v1230
        %v1239 = vadd.f32 %v1078, %v1231
        %v1240 = vadd.f32 %v1080, %v1232
        %v1241 = vadd.f32 %v1121, %v1233
        %v1242 = vadd.f32 %v1123, %v1234
        %v1243 = vmul.f32 %v1235, 0.7978846
        %v1244 = vmul.f32 %v1236, 0.7978846
        %v1245 = vmul.f32 %v1237, 0.7978846
        %v1246 = vmul.f32 %v1238, 0.7978846
        %v1247 = vmul.f32 %v1239, 0.7978846
        %v1248 = vmul.f32 %v1240, 0.7978846
        %v1249 = vmul.f32 %v1241, 0.7978846
        %v1250 = vmul.f32 %v1242, 0.7978846
        %v1251 = vtanh.pop %v1243
        %v1252 = vtanh.pop %v1244
        %v1253 = vtanh.pop %v1245
        %v1254 = vtanh.pop %v1246
        %v1255 = vtanh.pop %v1247
        %v1256 = vtanh.pop %v1248
        %v1257 = vtanh.pop %v1249
        %v1258 = vtanh.pop %v1250
        %v1259 = vadd.f32 %v1251, 1.0
        %v1260 = vadd.f32 %v1252, 1.0
        %v1261 = vadd.f32 %v1253, 1.0
        %v1262 = vadd.f32 %v1254, 1.0
        %v1263 = vadd.f32 %v1255, 1.0
        %v1264 = vadd.f32 %v1256, 1.0
        %v1265 = vadd.f32 %v1257, 1.0
        %v1266 = vadd.f32 %v1258, 1.0
        %v1267 = vmul.f32 %v1259, 0.5
        %v1268 = vmul.f32 %v1260, 0.5
        %v1269 = vmul.f32 %v1261, 0.5
        %v1270 = vmul.f32 %v1262, 0.5
        %v1271 = vmul.f32 %v1263, 0.5
        %v1272 = vmul.f32 %v1264, 0.5
        %v1273 = vmul.f32 %v1265, 0.5
        %v1274 = vmul.f32 %v1266, 0.5
        %v1275 = vmul.f32 %v1074, %v1267
        %v1276 = vmul.f32 %v1076, %v1268
        %v1277 = vmul.f32 %v1117, %v1269
        %v1278 = vmul.f32 %v1119, %v1270
        %v1279 = vmul.f32 %v1078, %v1271
        %v1280 = vmul.f32 %v1080, %v1272
        %v1281 = vmul.f32 %v1121, %v1273
        %v1282 = vmul.f32 %v1123, %v1274
        %v1283 = vmul.f32 %v1275, %v1160
        %v1284 = vmul.f32 %v1276, %v1162
        %v1285 = vmul.f32 %v1277, %v1203
        %v1286 = vmul.f32 %v1278, %v1205
        %v1287 = vmul.f32 %v1279, %v1164
        %v1288 = vmul.f32 %v1280, %v1166
        %v1289 = vmul.f32 %v1281, %v1207
        %v1290 = vmul.f32 %v1282, %v1209
        %v1291 = vld [vmem:[#allocation2] sm:$0xff]
        %v1292 = vld [vmem:[#allocation2 + $0x8] sm:$0xff]
        %v1293 = vld [vmem:[#allocation2 + $0x10] sm:$0xff]
        %v1294 = vld [vmem:[#allocation2 + $0x18] sm:$0xff]
        %v1295 = vpack.c.bf16 %v1287, %v1283
        %v1296 = vpack.c.bf16 %v1288, %v1284
        %v1297 = vpack.c.bf16 %v1289, %v1285
        %v1298 = vpack.c.bf16 %v1290, %v1286
        %v1299 = vld [vmem:[%s232] sm:$0xff]
        %v1300 = vld [vmem:[%s232 + $0x8] sm:$0xff]
        %v1301 = vld [vmem:[%s232 + $0x10] sm:$0xff]
        %v1302 = vld [vmem:[%s232 + $0x18] sm:$0xff]
        %v1303 = vld [vmem:[%s232 + $0x20] sm:$0xff]
        %v1304 = vld [vmem:[%s232 + $0x28] sm:$0xff]
        %v1305 = vld [vmem:[%s232 + $0x30] sm:$0xff]
        %v1306 = vld [vmem:[%s232 + $0x38] sm:$0xff]
        %v1307 = vld [vmem:[%s232 + $0x40] sm:$0xff]
        %v1308 = vld [vmem:[%s232 + $0x48] sm:$0xff]
        %v1309 = vld [vmem:[%s232 + $0x50] sm:$0xff]
        %v1310 = vld [vmem:[%s232 + $0x58] sm:$0xff]
        %v1311 = vld [vmem:[%s232 + $0x60] sm:$0xff]
        %v1312 = vld [vmem:[%s232 + $0x68] sm:$0xff]
        %v1313 = vld [vmem:[%s232 + $0x70] sm:$0xff]
        %v1314 = vld [vmem:[%s232 + $0x78] sm:$0xff]
        %v1315 = vld [vmem:[%s232 + $0x80] sm:$0xff]
        %v1316 = vld [vmem:[%s232 + $0x88] sm:$0xff]
        %v1317 = vld [vmem:[%s232 + $0x90] sm:$0xff]
        %v1318 = vld [vmem:[%s232 + $0x98] sm:$0xff]
        %v1319 = vld [vmem:[%s232 + $0xa0] sm:$0xff]
        %v1320 = vld [vmem:[%s232 + $0xa8] sm:$0xff]
        %v1321 = vld [vmem:[%s232 + $0xb0] sm:$0xff]
        %v1322 = vld [vmem:[%s232 + $0xb8] sm:$0xff]
        %v1323 = vld [vmem:[%s232 + $0xc0] sm:$0xff]
        %v1324 = vld [vmem:[%s232 + $0xc8] sm:$0xff]
        %v1325 = vld [vmem:[%s232 + $0xd0] sm:$0xff]
        %v1326 = vld [vmem:[%s232 + $0xd8] sm:$0xff]
        %v1327 = vld [vmem:[%s232 + $0xe0] sm:$0xff]
        %v1328 = vld [vmem:[%s232 + $0xe8] sm:$0xff]
        %v1329 = vld [vmem:[%s232 + $0xf0] sm:$0xff]
        %v1330 = vld [vmem:[%s232 + $0xf8] sm:$0xff]
        %v1331 = vld [vmem:[%s232 + $0x100] sm:$0xff]
        %v1332 = vld [vmem:[%s232 + $0x108] sm:$0xff]
        %v1333 = vld [vmem:[%s232 + $0x110] sm:$0xff]
        %v1334 = vld [vmem:[%s232 + $0x118] sm:$0xff]
        %v1335 = vld [vmem:[%s232 + $0x120] sm:$0xff]
        %v1336 = vld [vmem:[%s232 + $0x128] sm:$0xff]
        %v1337 = vld [vmem:[%s232 + $0x130] sm:$0xff]
        %v1338 = vld [vmem:[%s232 + $0x138] sm:$0xff]
        %v1339 = vld [vmem:[%s232 + $0x140] sm:$0xff]
        %v1340 = vld [vmem:[%s232 + $0x148] sm:$0xff]
        %v1341 = vld [vmem:[%s232 + $0x150] sm:$0xff]
        %v1342 = vld [vmem:[%s232 + $0x158] sm:$0xff]
        %v1343 = vld [vmem:[%s232 + $0x160] sm:$0xff]
        %v1344 = vld [vmem:[%s232 + $0x168] sm:$0xff]
        %v1345 = vld [vmem:[%s232 + $0x170] sm:$0xff]
        %v1346 = vld [vmem:[%s232 + $0x178] sm:$0xff]
        %v1347 = vld [vmem:[%s232 + $0x180] sm:$0xff]
        %v1348 = vld [vmem:[%s232 + $0x188] sm:$0xff]
        %v1349 = vld [vmem:[%s232 + $0x190] sm:$0xff]
        %v1350 = vld [vmem:[%s232 + $0x198] sm:$0xff]
        %v1351 = vld [vmem:[%s232 + $0x1a0] sm:$0xff]
        %v1352 = vld [vmem:[%s232 + $0x1a8] sm:$0xff]
        %v1353 = vld [vmem:[%s232 + $0x1b0] sm:$0xff]
        %v1354 = vld [vmem:[%s232 + $0x1b8] sm:$0xff]
        %v1355 = vld [vmem:[%s232 + $0x1c0] sm:$0xff]
        %v1356 = vld [vmem:[%s232 + $0x1c8] sm:$0xff]
        %v1357 = vld [vmem:[%s232 + $0x1d0] sm:$0xff]
        %v1358 = vld [vmem:[%s232 + $0x1d8] sm:$0xff]
        %v1359 = vld [vmem:[%s232 + $0x1e0] sm:$0xff]
        %v1360 = vld [vmem:[%s232 + $0x1e8] sm:$0xff]
        %v1361 = vld [vmem:[%s232 + $0x1f0] sm:$0xff]
        %v1362 = vld [vmem:[%s232 + $0x1f8] sm:$0xff]
        %v1427 = vunpack.c.l.b16 %v1299
        %v1428 = vunpack.c.h.b16 %v1299
        %v1429 = vunpack.c.l.b16 %v1300
        %v1430 = vunpack.c.h.b16 %v1300
        %v1431 = vunpack.c.l.b16 %v1301
        %v1432 = vunpack.c.h.b16 %v1301
        %v1433 = vunpack.c.l.b16 %v1302
        %v1434 = vunpack.c.h.b16 %v1302
        %v1435 = vunpack.c.l.b16 %v1303
        %v1436 = vunpack.c.h.b16 %v1303
        %v1437 = vunpack.c.l.b16 %v1304
        %v1438 = vunpack.c.h.b16 %v1304
        %v1439 = vunpack.c.l.b16 %v1305
        %v1440 = vunpack.c.h.b16 %v1305
        %v1441 = vunpack.c.l.b16 %v1306
        %v1442 = vunpack.c.h.b16 %v1306
        %v1443 = vunpack.c.l.b16 %v1307
        %v1444 = vunpack.c.h.b16 %v1307
        %v1445 = vunpack.c.l.b16 %v1308
        %v1446 = vunpack.c.h.b16 %v1308
        %v1447 = vunpack.c.l.b16 %v1309
        %v1448 = vunpack.c.h.b16 %v1309
        %v1449 = vunpack.c.l.b16 %v1310
        %v1450 = vunpack.c.h.b16 %v1310
        %v1451 = vunpack.c.l.b16 %v1311
        %v1452 = vunpack.c.h.b16 %v1311
        %v1453 = vunpack.c.l.b16 %v1312
        %v1454 = vunpack.c.h.b16 %v1312
        %v1455 = vunpack.c.l.b16 %v1313
        %v1456 = vunpack.c.h.b16 %v1313
        %v1457 = vunpack.c.l.b16 %v1314
        %v1458 = vunpack.c.h.b16 %v1314
        %v1459 = vunpack.c.l.b16 %v1315
        %v1460 = vunpack.c.h.b16 %v1315
        %v1461 = vunpack.c.l.b16 %v1316
        %v1462 = vunpack.c.h.b16 %v1316
        %v1463 = vunpack.c.l.b16 %v1317
        %v1464 = vunpack.c.h.b16 %v1317
        %v1465 = vunpack.c.l.b16 %v1318
        %v1466 = vunpack.c.h.b16 %v1318
        %v1467 = vunpack.c.l.b16 %v1319
        %v1468 = vunpack.c.h.b16 %v1319
        %v1469 = vunpack.c.l.b16 %v1320
        %v1470 = vunpack.c.h.b16 %v1320
        %v1471 = vunpack.c.l.b16 %v1321
        %v1472 = vunpack.c.h.b16 %v1321
        %v1473 = vunpack.c.l.b16 %v1322
        %v1474 = vunpack.c.h.b16 %v1322
        %v1475 = vunpack.c.l.b16 %v1323
        %v1476 = vunpack.c.h.b16 %v1323
        %v1477 = vunpack.c.l.b16 %v1324
        %v1478 = vunpack.c.h.b16 %v1324
        %v1479 = vunpack.c.l.b16 %v1325
        %v1480 = vunpack.c.h.b16 %v1325
        %v1481 = vunpack.c.l.b16 %v1326
        %v1482 = vunpack.c.h.b16 %v1326
        %v1483 = vunpack.c.l.b16 %v1327
        %v1484 = vunpack.c.h.b16 %v1327
        %v1485 = vunpack.c.l.b16 %v1328
        %v1486 = vunpack.c.h.b16 %v1328
        %v1487 = vunpack.c.l.b16 %v1329
        %v1488 = vunpack.c.h.b16 %v1329
        %v1489 = vunpack.c.l.b16 %v1330
        %v1490 = vunpack.c.h.b16 %v1330
        %v1491 = vunpack.c.l.b16 %v1331
        %v1492 = vunpack.c.h.b16 %v1331
        %v1493 = vunpack.c.l.b16 %v1332
        %v1494 = vunpack.c.h.b16 %v1332
        %v1495 = vunpack.c.l.b16 %v1333
        %v1496 = vunpack.c.h.b16 %v1333
        %v1497 = vunpack.c.l.b16 %v1334
        %v1498 = vunpack.c.h.b16 %v1334
        %v1499 = vunpack.c.l.b16 %v1335
        %v1500 = vunpack.c.h.b16 %v1335
        %v1501 = vunpack.c.l.b16 %v1336
        %v1502 = vunpack.c.h.b16 %v1336
        %v1503 = vunpack.c.l.b16 %v1337
        %v1504 = vunpack.c.h.b16 %v1337
        %v1505 = vunpack.c.l.b16 %v1338
        %v1506 = vunpack.c.h.b16 %v1338
        %v1507 = vunpack.c.l.b16 %v1339
        %v1508 = vunpack.c.h.b16 %v1339
        %v1509 = vunpack.c.l.b16 %v1340
        %v1510 = vunpack.c.h.b16 %v1340
        %v1511 = vunpack.c.l.b16 %v1341
        %v1512 = vunpack.c.h.b16 %v1341
        %v1513 = vunpack.c.l.b16 %v1342
        %v1514 = vunpack.c.h.b16 %v1342
        %v1515 = vunpack.c.l.b16 %v1343
        %v1516 = vunpack.c.h.b16 %v1343
        %v1517 = vunpack.c.l.b16 %v1344
        %v1518 = vunpack.c.h.b16 %v1344
        %v1519 = vunpack.c.l.b16 %v1345
        %v1520 = vunpack.c.h.b16 %v1345
        %v1521 = vunpack.c.l.b16 %v1346
        %v1522 = vunpack.c.h.b16 %v1346
        %v1523 = vunpack.c.l.b16 %v1347
        %v1524 = vunpack.c.h.b16 %v1347
        %v1525 = vunpack.c.l.b16 %v1348
        %v1526 = vunpack.c.h.b16 %v1348
        %v1527 = vunpack.c.l.b16 %v1349
        %v1528 = vunpack.c.h.b16 %v1349
        %v1529 = vunpack.c.l.b16 %v1350
        %v1530 = vunpack.c.h.b16 %v1350
        %v1531 = vunpack.c.l.b16 %v1351
        %v1532 = vunpack.c.h.b16 %v1351
        %v1533 = vunpack.c.l.b16 %v1352
        %v1534 = vunpack.c.h.b16 %v1352
        %v1535 = vunpack.c.l.b16 %v1353
        %v1536 = vunpack.c.h.b16 %v1353
        %v1537 = vunpack.c.l.b16 %v1354
        %v1538 = vunpack.c.h.b16 %v1354
        %v1539 = vunpack.c.l.b16 %v1355
        %v1540 = vunpack.c.h.b16 %v1355
        %v1541 = vunpack.c.l.b16 %v1356
        %v1542 = vunpack.c.h.b16 %v1356
        %v1543 = vunpack.c.l.b16 %v1357
        %v1544 = vunpack.c.h.b16 %v1357
        %v1545 = vunpack.c.l.b16 %v1358
        %v1546 = vunpack.c.h.b16 %v1358
        %v1547 = vunpack.c.l.b16 %v1359
        %v1548 = vunpack.c.h.b16 %v1359
        %v1549 = vunpack.c.l.b16 %v1360
        %v1550 = vunpack.c.h.b16 %v1360
        %v1551 = vunpack.c.l.b16 %v1361
        %v1552 = vunpack.c.h.b16 %v1361
        %v1553 = vunpack.c.l.b16 %v1362
        %v1554 = vunpack.c.h.b16 %v1362
        %v1555 = vpack.c.b16 %v1429, %v1427
        %v1556 = vpack.c.b16 %v1430, %v1428
        %v1557 = vpack.c.b16 %v1433, %v1431
        %v1558 = vpack.c.b16 %v1434, %v1432
        %v1559 = vpack.c.b16 %v1437, %v1435
        %v1560 = vpack.c.b16 %v1438, %v1436
        %v1561 = vpack.c.b16 %v1441, %v1439
        %v1562 = vpack.c.b16 %v1442, %v1440
        %v1563 = vpack.c.b16 %v1445, %v1443
        %v1564 = vpack.c.b16 %v1446, %v1444
        %v1565 = vpack.c.b16 %v1449, %v1447
        %v1566 = vpack.c.b16 %v1450, %v1448
        %v1567 = vpack.c.b16 %v1453, %v1451
        %v1568 = vpack.c.b16 %v1454, %v1452
        %v1569 = vpack.c.b16 %v1457, %v1455
        %v1570 = vpack.c.b16 %v1458, %v1456
        %v1571 = vpack.c.b16 %v1461, %v1459
        %v1572 = vpack.c.b16 %v1462, %v1460
        %v1573 = vpack.c.b16 %v1465, %v1463
        %v1574 = vpack.c.b16 %v1466, %v1464
        %v1575 = vpack.c.b16 %v1469, %v1467
        %v1576 = vpack.c.b16 %v1470, %v1468
        %v1577 = vpack.c.b16 %v1473, %v1471
        %v1578 = vpack.c.b16 %v1474, %v1472
        %v1579 = vpack.c.b16 %v1477, %v1475
        %v1580 = vpack.c.b16 %v1478, %v1476
        %v1581 = vpack.c.b16 %v1481, %v1479
        %v1582 = vpack.c.b16 %v1482, %v1480
        %v1583 = vpack.c.b16 %v1485, %v1483
        %v1584 = vpack.c.b16 %v1486, %v1484
        %v1585 = vpack.c.b16 %v1489, %v1487
        %v1586 = vpack.c.b16 %v1490, %v1488
        %v1587 = vpack.c.b16 %v1493, %v1491
        %v1588 = vpack.c.b16 %v1494, %v1492
        %v1589 = vpack.c.b16 %v1497, %v1495
        %v1590 = vpack.c.b16 %v1498, %v1496
        %v1591 = vpack.c.b16 %v1501, %v1499
        %v1592 = vpack.c.b16 %v1502, %v1500
        %v1593 = vpack.c.b16 %v1505, %v1503
        %v1594 = vpack.c.b16 %v1506, %v1504
        %v1595 = vpack.c.b16 %v1509, %v1507
        %v1596 = vpack.c.b16 %v1510, %v1508
        %v1597 = vpack.c.b16 %v1513, %v1511
        %v1598 = vpack.c.b16 %v1514, %v1512
        %v1599 = vpack.c.b16 %v1517, %v1515
        %v1600 = vpack.c.b16 %v1518, %v1516
        %v1601 = vpack.c.b16 %v1521, %v1519
        %v1602 = vpack.c.b16 %v1522, %v1520
        %v1603 = vpack.c.b16 %v1525, %v1523
        %v1604 = vpack.c.b16 %v1526, %v1524
        %v1605 = vpack.c.b16 %v1529, %v1527
        %v1606 = vpack.c.b16 %v1530, %v1528
        %v1607 = vpack.c.b16 %v1533, %v1531
        %v1608 = vpack.c.b16 %v1534, %v1532
        %v1609 = vpack.c.b16 %v1537, %v1535
        %v1610 = vpack.c.b16 %v1538, %v1536
        %v1611 = vpack.c.b16 %v1541, %v1539
        %v1612 = vpack.c.b16 %v1542, %v1540
        %v1613 = vpack.c.b16 %v1545, %v1543
        %v1614 = vpack.c.b16 %v1546, %v1544
        %v1615 = vpack.c.b16 %v1549, %v1547
        %v1616 = vpack.c.b16 %v1550, %v1548
        %v1617 = vpack.c.b16 %v1553, %v1551
        %v1618 = vpack.c.b16 %v1554, %v1552
        %1683 = vmatprep.subr.bf16.mxu0 %v1556
        %1684 = vmatpush1.bf16.msra.mxu0 %v1555
        %1685 = vmatprep.subr.bf16.mxu0 %v1558
        %1686 = vmatpush1.bf16.msra.mxu0 %v1557
        %1687 = vmatprep.subr.bf16.mxu0 %v1560
        %1688 = vmatpush1.bf16.msra.mxu0 %v1559
        %1689 = vmatprep.subr.bf16.mxu0 %v1562
        %1690 = vmatpush1.bf16.msra.mxu0 %v1561
        %1691 = vmatprep.subr.bf16.mxu0 %v1564
        %1692 = vmatpush1.bf16.msra.mxu0 %v1563
        %1693 = vmatprep.subr.bf16.mxu0 %v1566
        %1694 = vmatpush1.bf16.msra.mxu0 %v1565
        %1695 = vmatprep.subr.bf16.mxu0 %v1568
        %1696 = vmatpush1.bf16.msra.mxu0 %v1567
        %1697 = vmatprep.subr.bf16.mxu0 %v1570
        %1698 = vmatpush1.bf16.msra.mxu0 %v1569
        %1699 = vmatprep.subr.bf16.mxu0 %v1572
        %1700 = vmatpush1.bf16.msra.mxu0 %v1571
        %1701 = vmatprep.subr.bf16.mxu0 %v1574
        %1702 = vmatpush1.bf16.msra.mxu0 %v1573
        %1703 = vmatprep.subr.bf16.mxu0 %v1576
        %1704 = vmatpush1.bf16.msra.mxu0 %v1575
        %1705 = vmatprep.subr.bf16.mxu0 %v1578
        %1706 = vmatpush1.bf16.msra.mxu0 %v1577
        %1707 = vmatprep.subr.bf16.mxu0 %v1580
        %1708 = vmatpush1.bf16.msra.mxu0 %v1579
        %1709 = vmatprep.subr.bf16.mxu0 %v1582
        %1710 = vmatpush1.bf16.msra.mxu0 %v1581
        %1711 = vmatprep.subr.bf16.mxu0 %v1584
        %1712 = vmatpush1.bf16.msra.mxu0 %v1583
        %1713 = vmatprep.subr.bf16.mxu0 %v1586
        %1714 = vmatpush1.bf16.msra.mxu0 %v1585
        %1715 = vmatprep.mubr.bf16.mxu0 %v1296
        %1716 = vmatmul.mubr.bf16.gmra.mrb[0].mxu0 %v1295
        %v1717 = vpop.f32.mrb[0].mxu0
        %v1718 = vadd.f32 0.0, %v1717
        %v1719 = vpop.f32.mrb[0].mxu0
        %v1720 = vadd.f32 0.0, %v1719
        %v1721 = vpop.f32.mrb[0].mxu0
        %v1722 = vadd.f32 0.0, %v1721
        %v1723 = vpop.f32.mrb[0].mxu0
        %v1724 = vadd.f32 0.0, %v1723
        %1725 = vdwg.mxu0
        %1726 = vmatprep.subr.bf16.mxu0 %v1588
        %1727 = vmatpush1.bf16.msra.mxu0 %v1587
        %1728 = vmatprep.subr.bf16.mxu0 %v1590
        %1729 = vmatpush1.bf16.msra.mxu0 %v1589
        %1730 = vmatprep.subr.bf16.mxu0 %v1592
        %1731 = vmatpush1.bf16.msra.mxu0 %v1591
        %1732 = vmatprep.subr.bf16.mxu0 %v1594
        %1733 = vmatpush1.bf16.msra.mxu0 %v1593
        %1734 = vmatprep.subr.bf16.mxu0 %v1596
        %1735 = vmatpush1.bf16.msra.mxu0 %v1595
        %1736 = vmatprep.subr.bf16.mxu0 %v1598
        %1737 = vmatpush1.bf16.msra.mxu0 %v1597
        %1738 = vmatprep.subr.bf16.mxu0 %v1600
        %1739 = vmatpush1.bf16.msra.mxu0 %v1599
        %1740 = vmatprep.subr.bf16.mxu0 %v1602
        %1741 = vmatpush1.bf16.msra.mxu0 %v1601
        %1742 = vmatprep.subr.bf16.mxu0 %v1604
        %1743 = vmatpush1.bf16.msra.mxu0 %v1603
        %1744 = vmatprep.subr.bf16.mxu0 %v1606
        %1745 = vmatpush1.bf16.msra.mxu0 %v1605
        %1746 = vmatprep.subr.bf16.mxu0 %v1608
        %1747 = vmatpush1.bf16.msra.mxu0 %v1607
        %1748 = vmatprep.subr.bf16.mxu0 %v1610
        %1749 = vmatpush1.bf16.msra.mxu0 %v1609
        %1750 = vmatprep.subr.bf16.mxu0 %v1612
        %1751 = vmatpush1.bf16.msra.mxu0 %v1611
        %1752 = vmatprep.subr.bf16.mxu0 %v1614
        %1753 = vmatpush1.bf16.msra.mxu0 %v1613
        %1754 = vmatprep.subr.bf16.mxu0 %v1616
        %1755 = vmatpush1.bf16.msra.mxu0 %v1615
        %1756 = vmatprep.subr.bf16.mxu0 %v1618
        %1757 = vmatpush1.bf16.msra.mxu0 %v1617
        %1758 = vmatprep.mubr.bf16.mxu0 %v1298
        %1759 = vmatmul.mubr.bf16.gmra.mrb[0].mxu0 %v1297
        %v1760 = vpop.f32.mrb[0].mxu0
        %v1761 = vadd.f32 %v1718, %v1760
        %v1762 = vpop.f32.mrb[0].mxu0
        %v1763 = vadd.f32 %v1720, %v1762
        %v1764 = vpop.f32.mrb[0].mxu0
        %v1765 = vadd.f32 %v1722, %v1764
        %v1766 = vpop.f32.mrb[0].mxu0
        %v1767 = vadd.f32 %v1724, %v1766
        %1768 = vdwg.mxu0
        %v1769 = vadd.f32 %v1291, %v1761
        %v1770 = vadd.f32 %v1292, %v1763
        %v1771 = vadd.f32 %v1293, %v1765
        %v1772 = vadd.f32 %v1294, %v1767
        %1773 = vst [vmem:[#allocation2] sm:$0xff] %v1769
        %1774 = vst [vmem:[#allocation2 + $0x8] sm:$0xff] %v1770
        %1775 = vst [vmem:[#allocation2 + $0x10] sm:$0xff] %v1771
        %1776 = vst [vmem:[#allocation2 + $0x18] sm:$0xff] %v1772
        %p1777 = scmp.eq.s32.totalorder %s24, 1
        // Predicated region
        $region49: #{gemma2_mlp_fused.1} parent=31 // pred_check
          %p1778 = pneg %p1777
        $region50: #{gemma2_mlp_fused.1} parent=31 // pred_check_branch
          %1780 = sbr.rel (%p1778) target = $region52
        $region51: #{gemma2_mlp_fused.1} parent=31 // pred_region
          %v1781 = vld [vmem:[#allocation2] sm:$0xff]
          %v1782 = vld [vmem:[#allocation2 + $0x8] sm:$0xff]
          %v1783 = vld [vmem:[#allocation2 + $0x10] sm:$0xff]
          %v1784 = vld [vmem:[#allocation2 + $0x18] sm:$0xff]
          %v1785 = vpack.c.bf16 %v1783, %v1781
          %v1786 = vpack.c.bf16 %v1784, %v1782
          %v1789 = vunpack.c.l.b16 %v1785
          %v1790 = vunpack.c.l.b16 %v1786
          %v1791 = vunpack.c.h.b16 %v1785
          %v1792 = vunpack.c.h.b16 %v1786
          %v1793 = vpack.c.b16 %v1790, %v1789
          %v1794 = vpack.c.b16 %v1792, %v1791
          %1797 = vst [vmem:[#allocation9] sm:$0xff] %v1793
          %1798 = vst [vmem:[#allocation9 + $0x8] sm:$0xff] %v1794
        $region52: #{gemma2_mlp_fused.1} parent=31 // pred_fallthru
          _
        // Predicated region
        $region53: #{gemma2_mlp_fused.1} parent=31 // pred_check
          %p1799 = pneg %p127
        $region54: #{gemma2_mlp_fused.1} parent=31 // pred_check_branch
          %1801 = sbr.rel (%p1799) target = $region56
        $region55: #{gemma2_mlp_fused.1} parent=31 // pred_region
          %s1802 = smul.u32 2, %s23
          %s1804 = ssub.s32 256, 256
          %1805 = vsyncadd [#allocation5], %s1804
          %s1806 = smul.addr %s1802, 2
          %s1807 = smul.addr %s1806, 64
          %s1808 = scalar_lea.hbm %s3, %s1807
          %s1809 = sshll.u32 [#allocation9], 4
          %s1810 = int_to_ptr.vmem [resolvable:$true] %s1809
          %1815 = dma.vmem_to_hbm [thread:$0]  %s1810, 256, %s1808, [#allocation5], 128, 128, 8
        $region56: #{gemma2_mlp_fused.1} parent=31 // pred_fallthru
          _
        // Predicated region
        $region57: #{gemma2_mlp_fused.1} parent=31 // pred_check
          %p1816 = pneg %p127
        $region58: #{gemma2_mlp_fused.1} parent=31 // pred_check_branch
          %1818 = sbr.rel (%p1816) target = $region60
        $region59: #{gemma2_mlp_fused.1} parent=31 // pred_region
          %1819 = dma.done [#allocation5], 256
        $region60: #{gemma2_mlp_fused.1} parent=31 // pred_fallthru
          _
      $region32: #{gemma2_mlp_fused.1} parent=5 // pred_fallthru
        _
      %p1820 = scmp.le.s32.totalorder 2, %s14
      // Predicated region
      $region61: #{gemma2_mlp_fused.1} parent=5 // pred_check
        %p1821 = pneg %p1820
      $region62: #{gemma2_mlp_fused.1} parent=5 // pred_check_branch
        %1823 = sbr.rel (%p1821) target = $region64
      $region63: #{gemma2_mlp_fused.1} parent=5 // pred_region
        %s1824 = ssub.s32 %s14, 2
      $region64: #{gemma2_mlp_fused.1} parent=5 // pred_fallthru
        _
    $region6: #{gemma2_mlp_fused.1} parent=1 // loop_footer
      %s18 = sadd.s32 1, %s14
    $region7: #{gemma2_mlp_fused.1} parent=1 // loop_footer_branch
      %13 = sbr.rel target = $region3
    $region8: #{gemma2_mlp_fused.1} parent=1 // loop_exit
      _
    %1825 = vsyncpa [#allocation4], 1
    %s1826 = scalar_lea.sflag [#allocation4], 1
    %1827 = vsyncpa %s1826, 1
    %1828 = vsyncpa [#allocation7], 1
    %s1829 = scalar_lea.sflag [#allocation7], 1
    %1830 = vsyncpa %s1829, 1
    %1831 = vsyncpa [#allocation5], 1
    %s1832 = scalar_lea.sflag [#allocation5], 1
    %1833 = vsyncpa %s1832, 1

</llo_original>
